<compile_context>
chip_gen: v5e
topology: v5e:2x2
jax: 0.10.0
libtpu: 0.0.40
codegen_flags: <defaults>
</compile_context>

<pallas_src>
import functools

import jax
import jax.numpy as jnp
import numpy as np
from jax.experimental import pallas as pl
from jax.experimental.pallas import tpu as pltpu

EPS = 1e-5


def _layernorm(v, gamma, beta):
    # One-pass variance E[x^2] - mu^2, clamped at 0 (can go slightly negative
    # in f32 when |mu| >> sigma; the reference uses the two-pass form).
    mu = jnp.mean(v, axis=-1, keepdims=True)
    var = jnp.maximum(jnp.mean(v * v, axis=-1, keepdims=True) - mu * mu, 0.0)
    return (v - mu) * jax.lax.rsqrt(var + EPS) * gamma + beta


def transformer_block_kernel(
    x_ref,      # (R, H)   f32 token rows for this tile (R = block_b * S)
    vec_ref,    # (8, 3H)  f32 packed gammas/betas/biases
    wqkv_ref,   # (H, 3H)  bf16 (1/sqrt(dh) folded into the Q columns)
    wo_ref,     # (H, H)   bf16
    w1_ref,     # (H, 2H)  bf16
    w2_ref,     # (2H, H)  bf16
    o_ref,      # (R, H)
    *, num_heads: int, block_b: int, seq_len: int,
):
    x = x_ref[...]                                   # (R, H) f32
    R, H = x.shape
    dh = H // num_heads
    cdt = wqkv_ref.dtype                             # bf16 MXU operand dtype

    # Unpack the bias/affine slab (lane-aligned static slices).
    vec = vec_ref[...]
    bqkv = vec[0:1, :]                               # (1, 3H)
    g1, be1, bo = vec[1:2, :H], vec[1:2, H:2 * H], vec[1:2, 2 * H:]
    g2, be2, b2 = vec[2:3, :H], vec[2:3, H:2 * H], vec[2:3, 2 * H:]
    b1, gm, bm = vec[3:4, :2 * H], vec[4:5, :2 * H], vec[5:6, :2 * H]

    # ---- attention branch (pre-norm) ----
    nx = _layernorm(x, g1, be1)
    qkv = jnp.dot(nx.astype(cdt), wqkv_ref[...],
                  preferred_element_type=jnp.float32) + bqkv       # (R, 3H) f32
    qkv = qkv.astype(cdt)          # single bf16 cast before any head slicing
    wo = wo_ref[...]               # (H, H) bf16, VMEM-resident

    attn = jnp.zeros((R, H), jnp.float32)
    for h in range(num_heads):
        lo = h * dh
        qh = qkv[:, lo:lo + dh].reshape(block_b, seq_len, dh)
        kh = qkv[:, H + lo:H + lo + dh].reshape(block_b, seq_len, dh)
        vh = qkv[:, 2 * H + lo:2 * H + lo + dh].reshape(block_b, seq_len, dh)
        # 1/sqrt(dh) already folded into the Q columns of wqkv/bqkv.
        s = jnp.einsum("bqd,bkd->bqk", qh, kh,
                       preferred_element_type=jnp.float32)         # (Bt,S,S)
        s = s - jnp.max(s, axis=-1, keepdims=True)
        p = jnp.exp(s)
        # EUP approx reciprocal: ~2^-12 rel error vs an exact softmax
        # (well inside the test tolerance; not bit-exact vs frameworks).
        p = p * pl.reciprocal(jnp.sum(p, axis=-1, keepdims=True), approx=True)
        oh = jnp.einsum("bqk,bkd->bqd", p.astype(cdt), vh,
                        preferred_element_type=jnp.float32)        # (Bt,S,dh)
        # Fold the output projection into the per-head accumulation:
        #   concat_h(oh) @ Wo == sum_h  oh @ Wo[h*dh:(h+1)*dh, :]
        # -> no 32-lane masked stores, no attn scratch, no concatenate.
        attn = attn + jnp.dot(oh.reshape(R, dh).astype(cdt), wo[lo:lo + dh, :],
                              preferred_element_type=jnp.float32)  # (R, H)
    x = x + attn + bo                                # residual 1 (+ out-proj bias)

    # ---- MLP branch (pre-norm) ----
    nx = _layernorm(x, g2, be2)
    h1 = jnp.dot(nx.astype(cdt), w1_ref[...],
                 preferred_element_type=jnp.float32) + b1
    h1 = _layernorm(h1, gm, bm)
    # ELU(alpha=1) with clamped exp argument (no overflow on the dead branch).
    h1 = jnp.where(h1 > 0, h1, jnp.exp(jnp.minimum(h1, 0.0)) - 1.0)
    h2 = jnp.dot(h1.astype(cdt), w2_ref[...],
                 preferred_element_type=jnp.float32) + b2

    o_ref[...] = (x + h2).astype(o_ref.dtype)        # residual 2


# --------------------------------------------------------------------------
# Host-side helpers (parameter prep hoisted out of the per-call wrapper).
# --------------------------------------------------------------------------

def prepare_params(params, *, num_heads):
    """One-time prep: fold the query scale, cast weights to bf16, pack biases."""
    H = params["wqkv"].shape[0]
    dh = H // num_heads
    scale = 1.0 / float(np.sqrt(dh))
    cdt = jnp.bfloat16

    wqkv = params["wqkv"].at[:, :H].multiply(scale).astype(cdt)
    bqkv = params["bqkv"].at[:, :H].multiply(scale)

    # Packed (8, 3H) f32 slab:
    #   row0: bqkv | row1: [g1|be1|bo] | row2: [g2|be2|b2]
    #   row3: b1   | row4: gm          | row5: bm          (rows 6,7 pad)
    vec = jnp.zeros((8, 3 * H), jnp.float32)
    vec = vec.at[0].set(bqkv[0])
    vec = vec.at[1, :H].set(params["g1"][0])
    vec = vec.at[1, H:2 * H].set(params["be1"][0])
    vec = vec.at[1, 2 * H:].set(params["bo"][0])
    vec = vec.at[2, :H].set(params["g2"][0])
    vec = vec.at[2, H:2 * H].set(params["be2"][0])
    vec = vec.at[2, 2 * H:].set(params["b2"][0])
    vec = vec.at[3, :2 * H].set(params["b1"][0])
    vec = vec.at[4, :2 * H].set(params["gm"][0])
    vec = vec.at[5, :2 * H].set(params["bm"][0])

    return dict(vec=vec, wqkv=wqkv,
                wo=params["wo"].astype(cdt),
                w1=params["w1"].astype(cdt),
                w2=params["w2"].astype(cdt))


def _vmem_capacity_bytes():
    try:
        info = pltpu.get_tpu_info()
        return int(getattr(info, "vmem_capacity_bytes", 128 * 1024 * 1024))
    except Exception:
        return 128 * 1024 * 1024


def _default_target_rows():
    # v5e: smaller MXU + single vst slot -> keep f32 intermediates from spilling.
    try:
        kind = jax.devices()[0].device_kind.lower()
    except Exception:
        return 256
    if "v5 lite" in kind or "v5lite" in kind or "v5e" in kind:
        return 128
    return 256


def _pick_block_b(B, S, target_rows):
    def ok(c):
        # (8,128) alignment: row block must be a multiple of 8 or span all rows.
        return B % c == 0 and ((c * S) % 8 == 0 or c == B)

    cands = [c for c in range(1, B + 1) if ok(c) and c * S <= max(target_rows, S)]
    if not cands:
        return B
    best = max(cands)
    # Prefer >= 2 grid steps so v7x's second TensorCore gets work.
    if best == B and B > 1:
        smaller = [c for c in cands if c < B]
        if smaller:
            best = max(smaller)
    return best


def _const_index_map(ndim):
    return lambda b: (0,) * ndim


def transformer_block(x, prepared, *, num_heads, target_rows=None):
    B, S, H = x.shape
    assert H % num_heads == 0
    dh = H // num_heads

    if target_rows is None:
        target_rows = _default_target_rows()
    vmem_cap = _vmem_capacity_bytes()

    block_b = _pick_block_b(B, S, target_rows)
    R = block_b * S
    grid = (B // block_b,)

    weights = (prepared["vec"], prepared["wqkv"], prepared["wo"],
               prepared["w1"], prepared["w2"])

    # --- VMEM budgeting (review: don't hard-code 64 MiB) ---
    weight_bytes = sum(int(w.size) * w.dtype.itemsize for w in weights)
    single_buffer_weights = 2 * weight_bytes > vmem_cap // 4
    act_bytes = 2 * 2 * R * H * 4                      # double-buffered in+out tiles
    interm_bytes = 4 * R * (3 * H + 2 * H + 2 * H)     # f32 intermediate headroom
    footprint = ((1 if single_buffer_weights else 2) * weight_bytes
                 + act_bytes + interm_bytes)
    vmem_limit = int(min(0.85 * vmem_cap,
                         max(32 * 1024 * 1024, footprint + (8 << 20))))

    def const_spec(shape):
        idx = _const_index_map(len(shape))
        if single_buffer_weights and hasattr(pl, "Buffered"):
            try:  # single-buffer resident weights on VMEM-tight parts (v7x, big H)
                return pl.BlockSpec(shape, idx, pipeline_mode=pl.Buffered(1))
            except TypeError:  # older jax: no pipeline_mode kwarg
                pass
        return pl.BlockSpec(shape, idx)

    in_specs = [pl.BlockSpec((R, H), lambda b: (b, 0))]
    in_specs += [const_spec(tuple(w.shape)) for w in weights]

    # Advisory cost estimate for XLA's surrounding schedule.
    tokens = B * S
    flops = 2 * tokens * 8 * H * H + 4 * B * num_heads * S * S * dh
    transc = B * num_heads * S * S + tokens * 2 * H          # softmax exp + ELU exp
    bytes_acc = 2 * tokens * H * 4 + weight_bytes
    cost = pl.CostEstimate(flops=flops, transcendentals=transc,
                           bytes_accessed=bytes_acc)

    kernel = functools.partial(transformer_block_kernel,
                               num_heads=num_heads, block_b=block_b, seq_len=S)

    out2 = pl.pallas_call(
        kernel,
        out_shape=jax.ShapeDtypeStruct((B * S, H), x.dtype),
        grid_spec=pltpu.PrefetchScalarGridSpec(
            num_scalar_prefetch=0,
            grid=grid,
            in_specs=in_specs,
            out_specs=pl.BlockSpec((R, H), lambda b: (b, 0)),
        ),
        compiler_params=pltpu.CompilerParams(
            dimension_semantics=("parallel",),
            vmem_limit_bytes=vmem_limit),
        cost_estimate=cost,
    )(x.reshape(B * S, H), *weights)
    return out2.reshape(B, S, H)


# --------------------------------------------------------------------------
# Init + pure-JAX reference (PyTorch eval-mode semantics) + test.
# --------------------------------------------------------------------------

def init_params(key, hidden_size, num_heads):
    H = hidden_size
    ks = jax.random.split(key, 6)
    std = 0.02
    # PyTorch nn.Linear stores (out, in); pre-transpose to (in, out).
    in_proj_w = jax.random.normal(ks[0], (3 * H, H), jnp.float32) * std
    out_proj_w = jax.random.normal(ks[1], (H, H), jnp.float32) * std
    mlp_w1 = jax.random.normal(ks[2], (2 * H, H), jnp.float32) * std
    mlp_w2 = jax.random.normal(ks[3], (H, 2 * H), jnp.float32) * std
    return dict(
        g1=jnp.ones((1, H), jnp.float32), be1=jnp.zeros((1, H), jnp.float32),
        wqkv=in_proj_w.T, bqkv=jnp.zeros((1, 3 * H), jnp.float32),
        wo=out_proj_w.T, bo=jnp.zeros((1, H), jnp.float32),
        g2=jnp.ones((1, H), jnp.float32), be2=jnp.zeros((1, H), jnp.float32),
        w1=mlp_w1.T, b1=jax.random.normal(ks[4], (1, 2 * H), jnp.float32) * std,
        gm=jnp.ones((1, 2 * H), jnp.float32), bm=jnp.zeros((1, 2 * H), jnp.float32),
        w2=mlp_w2.T, b2=jax.random.normal(ks[5], (1, H), jnp.float32) * std,
    )


def reference(x, p, num_heads):
    def ln(v, g, b):
        mu = jnp.mean(v, -1, keepdims=True)
        var = jnp.mean((v - mu) ** 2, -1, keepdims=True)
        return (v - mu) / jnp.sqrt(var + EPS) * g + b

    B, S, H = x.shape
    dh = H // num_heads
    nx = ln(x, p["g1"][0], p["be1"][0])
    qkv = nx @ p["wqkv"] + p["bqkv"][0]
    q, k, v = qkv[..., :H], qkv[..., H:2 * H], qkv[..., 2 * H:]
    q = q.reshape(B, S, num_heads, dh).transpose(0, 2, 1, 3) / jnp.sqrt(dh)
    k = k.reshape(B, S, num_heads, dh).transpose(0, 2, 1, 3)
    v = v.reshape(B, S, num_heads, dh).transpose(0, 2, 1, 3)
    s = jnp.einsum("bhqd,bhkd->bhqk", q, k)
    pmat = jax.nn.softmax(s, axis=-1)
    o = jnp.einsum("bhqk,bhkd->bhqd", pmat, v).transpose(0, 2, 1, 3).reshape(B, S, H)
    o = o @ p["wo"] + p["bo"][0]
    x = x + o
    nx = ln(x, p["g2"][0], p["be2"][0])
    h1 = nx @ p["w1"] + p["b1"][0]
    h1 = ln(h1, p["gm"][0], p["bm"][0])
    h1 = jnp.where(h1 > 0, h1, jnp.exp(jnp.minimum(h1, 0.0)) - 1.0)
    h2 = h1 @ p["w2"] + p["b2"][0]
    return x + h2


if __name__ == "__main__":
    hidden_size, num_heads = 128, 4   # module defaults
    B, S = 2, 8

    key = jax.random.PRNGKey(0)
    kx, kp = jax.random.split(key)
    x = jax.random.normal(kx, (B, S, hidden_size), jnp.float32)
    params = init_params(kp, hidden_size, num_heads)
    prepared = prepare_params(params, num_heads=num_heads)   # hoisted, done once

    out = transformer_block(x, prepared, num_heads=num_heads)
    out = jax.block_until_ready(out)

    ref = reference(x, params, num_heads)
    # bf16 MXU operands (f32 accumulation) + approx softmax recip vs f32 reference.
    np.testing.assert_allclose(np.asarray(out), np.asarray(ref),
                               atol=2e-2, rtol=2e-2)

    print("KERNEL_OK")
</pallas_src>

<mosaic_0001>
module attributes {stable_mosaic.version = 11 : i64} {
  func.func @transformer_block_kernel(%arg0: i32, %arg1: memref<8x128xf32, #tpu.memory_space<vmem>>, %arg2: memref<8x384xf32, #tpu.memory_space<vmem>>, %arg3: memref<128x384xbf16, #tpu.memory_space<vmem>>, %arg4: memref<128x128xbf16, #tpu.memory_space<vmem>>, %arg5: memref<128x256xbf16, #tpu.memory_space<vmem>>, %arg6: memref<256x128xbf16, #tpu.memory_space<vmem>>, %arg7: memref<8x128xf32, #tpu.memory_space<vmem>>) attributes {dimension_semantics = [#tpu.dimension_semantics<parallel>], iteration_bounds = array<i64: 2>, scalar_prefetch = 0 : i64, scratch_operands = 0 : i64, tpu.core_type = #tpu.core_type<tc>, window_params = [{transform_indices = @transform_0, window_bounds = array<i64: 8, 128>}, {pipeline_mode = #tpu.pipeline_mode<synchronous>, transform_indices = @transform_1, window_bounds = array<i64: 8, 384>}, {pipeline_mode = #tpu.pipeline_mode<synchronous>, transform_indices = @transform_2, window_bounds = array<i64: 128, 384>}, {pipeline_mode = #tpu.pipeline_mode<synchronous>, transform_indices = @transform_3, window_bounds = array<i64: 128, 128>}, {pipeline_mode = #tpu.pipeline_mode<synchronous>, transform_indices = @transform_4, window_bounds = array<i64: 128, 256>}, {pipeline_mode = #tpu.pipeline_mode<synchronous>, transform_indices = @transform_5, window_bounds = array<i64: 256, 128>}, {transform_indices = @transform_6, window_bounds = array<i64: 8, 128>}]} {
    %c0 = arith.constant 0 : index
    %c0_0 = arith.constant 0 : index
    %0 = vector.load %arg1[%c0, %c0_0] : memref<8x128xf32, #tpu.memory_space<vmem>>, vector<8x128xf32>
    %c0_1 = arith.constant 0 : index
    %c0_2 = arith.constant 0 : index
    %1 = vector.load %arg2[%c0_1, %c0_2] : memref<8x384xf32, #tpu.memory_space<vmem>>, vector<8x384xf32>
    %2 = vector.extract_strided_slice %1 {offsets = [0, 0], sizes = [1, 384], strides = [1, 1]} : vector<8x384xf32> to vector<1x384xf32>
    %3 = vector.extract_strided_slice %1 {offsets = [1, 0], sizes = [1, 128], strides = [1, 1]} : vector<8x384xf32> to vector<1x128xf32>
    %4 = vector.extract_strided_slice %1 {offsets = [1, 128], sizes = [1, 128], strides = [1, 1]} : vector<8x384xf32> to vector<1x128xf32>
    %5 = vector.extract_strided_slice %1 {offsets = [1, 256], sizes = [1, 128], strides = [1, 1]} : vector<8x384xf32> to vector<1x128xf32>
    %6 = vector.extract_strided_slice %1 {offsets = [2, 0], sizes = [1, 128], strides = [1, 1]} : vector<8x384xf32> to vector<1x128xf32>
    %7 = vector.extract_strided_slice %1 {offsets = [2, 128], sizes = [1, 128], strides = [1, 1]} : vector<8x384xf32> to vector<1x128xf32>
    %8 = vector.extract_strided_slice %1 {offsets = [2, 256], sizes = [1, 128], strides = [1, 1]} : vector<8x384xf32> to vector<1x128xf32>
    %9 = vector.extract_strided_slice %1 {offsets = [3, 0], sizes = [1, 256], strides = [1, 1]} : vector<8x384xf32> to vector<1x256xf32>
    %10 = vector.extract_strided_slice %1 {offsets = [4, 0], sizes = [1, 256], strides = [1, 1]} : vector<8x384xf32> to vector<1x256xf32>
    %11 = vector.extract_strided_slice %1 {offsets = [5, 0], sizes = [1, 256], strides = [1, 1]} : vector<8x384xf32> to vector<1x256xf32>
    %cst = arith.constant dense<0.000000e+00> : vector<8xf32>
    %12 = vector.multi_reduction <add>, %0, %cst [1] : vector<8x128xf32> to vector<8xf32>
    %13 = vector.shape_cast %12 : vector<8xf32> to vector<8x1xf32>
    %cst_3 = arith.constant 1.280000e+02 : f32
    %14 = vector.broadcast %cst_3 : f32 to vector<8x1xf32>
    %15 = arith.divf %13, %14 : vector<8x1xf32>
    %16 = arith.mulf %0, %0 : vector<8x128xf32>
    %cst_4 = arith.constant dense<0.000000e+00> : vector<8xf32>
    %17 = vector.multi_reduction <add>, %16, %cst_4 [1] : vector<8x128xf32> to vector<8xf32>
    %18 = vector.shape_cast %17 : vector<8xf32> to vector<8x1xf32>
    %cst_5 = arith.constant 1.280000e+02 : f32
    %19 = vector.broadcast %cst_5 : f32 to vector<8x1xf32>
    %20 = arith.divf %18, %19 : vector<8x1xf32>
    %21 = arith.mulf %15, %15 : vector<8x1xf32>
    %22 = arith.subf %20, %21 : vector<8x1xf32>
    %cst_6 = arith.constant 0.000000e+00 : f32
    %23 = vector.broadcast %cst_6 : f32 to vector<8x1xf32>
    %24 = arith.maximumf %22, %23 : vector<8x1xf32>
    %25 = vector.broadcast %15 : vector<8x1xf32> to vector<8x128xf32>
    %26 = arith.subf %0, %25 : vector<8x128xf32>
    %cst_7 = arith.constant 9.99999974E-6 : f32
    %27 = vector.broadcast %cst_7 : f32 to vector<8x1xf32>
    %28 = arith.addf %24, %27 : vector<8x1xf32>
    %29 = math.rsqrt %28 : vector<8x1xf32>
    %30 = vector.broadcast %29 : vector<8x1xf32> to vector<8x128xf32>
    %31 = arith.mulf %26, %30 : vector<8x128xf32>
    %32 = vector.broadcast %3 : vector<1x128xf32> to vector<8x128xf32>
    %33 = arith.mulf %31, %32 : vector<8x128xf32>
    %34 = vector.broadcast %4 : vector<1x128xf32> to vector<8x128xf32>
    %35 = arith.addf %33, %34 : vector<8x128xf32>
    %36 = arith.truncf %35 : vector<8x128xf32> to vector<8x128xbf16>
    %c0_8 = arith.constant 0 : index
    %c0_9 = arith.constant 0 : index
    %37 = vector.load %arg3[%c0_8, %c0_9] : memref<128x384xbf16, #tpu.memory_space<vmem>>, vector<128x384xbf16>
    %cst_10 = arith.constant dense<0.000000e+00> : vector<8x384xf32>
    %38 = tpu.matmul %36, %37, %cst_10 {dimension_numbers = #tpu.dot_dimension_numbers<[1], [0], [0], [1], [0, 0, 1, 1], [], []>} : vector<8x128xbf16>, vector<128x384xbf16>, vector<8x384xf32> -> vector<8x384xf32>
    %39 = vector.broadcast %2 : vector<1x384xf32> to vector<8x384xf32>
    %40 = arith.addf %38, %39 : vector<8x384xf32>
    %41 = arith.truncf %40 : vector<8x384xf32> to vector<8x384xbf16>
    %c0_11 = arith.constant 0 : index
    %c0_12 = arith.constant 0 : index
    %42 = vector.load %arg4[%c0_11, %c0_12] : memref<128x128xbf16, #tpu.memory_space<vmem>>, vector<128x128xbf16>
    %cst_13 = arith.constant 0.000000e+00 : f32
    %43 = vector.broadcast %cst_13 : f32 to vector<8x128xf32>
    %44 = vector.extract_strided_slice %41 {offsets = [0, 0], sizes = [8, 32], strides = [1, 1]} : vector<8x384xbf16> to vector<8x32xbf16>
    %45 = vector.shape_cast %44 : vector<8x32xbf16> to vector<1x8x32xbf16>
    %46 = vector.extract_strided_slice %41 {offsets = [0, 128], sizes = [8, 32], strides = [1, 1]} : vector<8x384xbf16> to vector<8x32xbf16>
    %47 = vector.shape_cast %46 : vector<8x32xbf16> to vector<1x8x32xbf16>
    %48 = vector.extract_strided_slice %41 {offsets = [0, 256], sizes = [8, 32], strides = [1, 1]} : vector<8x384xbf16> to vector<8x32xbf16>
    %49 = vector.shape_cast %48 : vector<8x32xbf16> to vector<1x8x32xbf16>
    "tpu.trace_start"() <{level = 10 : i32, message = "bqd,bkd->bqk"}> : () -> ()
    %cst_14 = arith.constant dense<0.000000e+00> : vector<1x8x8xf32>
    %50 = tpu.matmul %45, %47, %cst_14 {dimension_numbers = #tpu.dot_dimension_numbers<[2], [2], [1], [1], [0, 0, 0, 1, 1, 1], [0], [0]>} : vector<1x8x32xbf16>, vector<1x8x32xbf16>, vector<1x8x8xf32> -> vector<1x8x8xf32>
    "tpu.trace_stop"() : () -> ()
    %cst_15 = arith.constant dense<0xFF800000> : vector<1x8xf32>
    %51 = vector.multi_reduction <maximumf>, %50, %cst_15 [2] : vector<1x8x8xf32> to vector<1x8xf32>
    %52 = vector.shape_cast %51 : vector<1x8xf32> to vector<1x8x1xf32>
    %53 = vector.broadcast %52 : vector<1x8x1xf32> to vector<1x8x8xf32>
    %54 = arith.subf %50, %53 : vector<1x8x8xf32>
    %55 = math.exp %54 : vector<1x8x8xf32>
    %cst_16 = arith.constant dense<0.000000e+00> : vector<1x8xf32>
    %56 = vector.multi_reduction <add>, %55, %cst_16 [2] : vector<1x8x8xf32> to vector<1x8xf32>
    %57 = vector.shape_cast %56 : vector<1x8xf32> to vector<1x8x1xf32>
    %58 = tpu.reciprocal %57 {approx = true} : vector<1x8x1xf32> -> vector<1x8x1xf32>
    %59 = vector.broadcast %58 : vector<1x8x1xf32> to vector<1x8x8xf32>
    %60 = arith.mulf %55, %59 : vector<1x8x8xf32>
    %61 = arith.truncf %60 : vector<1x8x8xf32> to vector<1x8x8xbf16>
    "tpu.trace_start"() <{level = 10 : i32, message = "bqk,bkd->bqd"}> : () -> ()
    %cst_17 = arith.constant dense<0.000000e+00> : vector<1x8x32xf32>
    %62 = tpu.matmul %61, %49, %cst_17 {dimension_numbers = #tpu.dot_dimension_numbers<[2], [1], [1], [2], [0, 0, 0, 1, 1, 2], [0], [0]>} : vector<1x8x8xbf16>, vector<1x8x32xbf16>, vector<1x8x32xf32> -> vector<1x8x32xf32>
    "tpu.trace_stop"() : () -> ()
    %63 = vector.shape_cast %62 : vector<1x8x32xf32> to vector<8x32xf32>
    %64 = arith.truncf %63 : vector<8x32xf32> to vector<8x32xbf16>
    %65 = vector.extract_strided_slice %42 {offsets = [0, 0], sizes = [32, 128], strides = [1, 1]} : vector<128x128xbf16> to vector<32x128xbf16>
    %cst_18 = arith.constant dense<0.000000e+00> : vector<8x128xf32>
    %66 = tpu.matmul %64, %65, %cst_18 {dimension_numbers = #tpu.dot_dimension_numbers<[1], [0], [0], [1], [0, 0, 1, 1], [], []>} : vector<8x32xbf16>, vector<32x128xbf16>, vector<8x128xf32> -> vector<8x128xf32>
    %67 = arith.addf %43, %66 : vector<8x128xf32>
    %68 = vector.extract_strided_slice %41 {offsets = [0, 32], sizes = [8, 32], strides = [1, 1]} : vector<8x384xbf16> to vector<8x32xbf16>
    %69 = vector.shape_cast %68 : vector<8x32xbf16> to vector<1x8x32xbf16>
    %70 = vector.extract_strided_slice %41 {offsets = [0, 160], sizes = [8, 32], strides = [1, 1]} : vector<8x384xbf16> to vector<8x32xbf16>
    %71 = vector.shape_cast %70 : vector<8x32xbf16> to vector<1x8x32xbf16>
    %72 = vector.extract_strided_slice %41 {offsets = [0, 288], sizes = [8, 32], strides = [1, 1]} : vector<8x384xbf16> to vector<8x32xbf16>
    %73 = vector.shape_cast %72 : vector<8x32xbf16> to vector<1x8x32xbf16>
    "tpu.trace_start"() <{level = 10 : i32, message = "bqd,bkd->bqk"}> : () -> ()
    %cst_19 = arith.constant dense<0.000000e+00> : vector<1x8x8xf32>
    %74 = tpu.matmul %69, %71, %cst_19 {dimension_numbers = #tpu.dot_dimension_numbers<[2], [2], [1], [1], [0, 0, 0, 1, 1, 1], [0], [0]>} : vector<1x8x32xbf16>, vector<1x8x32xbf16>, vector<1x8x8xf32> -> vector<1x8x8xf32>
    "tpu.trace_stop"() : () -> ()
    %cst_20 = arith.constant dense<0xFF800000> : vector<1x8xf32>
    %75 = vector.multi_reduction <maximumf>, %74, %cst_20 [2] : vector<1x8x8xf32> to vector<1x8xf32>
    %76 = vector.shape_cast %75 : vector<1x8xf32> to vector<1x8x1xf32>
    %77 = vector.broadcast %76 : vector<1x8x1xf32> to vector<1x8x8xf32>
    %78 = arith.subf %74, %77 : vector<1x8x8xf32>
    %79 = math.exp %78 : vector<1x8x8xf32>
    %cst_21 = arith.constant dense<0.000000e+00> : vector<1x8xf32>
    %80 = vector.multi_reduction <add>, %79, %cst_21 [2] : vector<1x8x8xf32> to vector<1x8xf32>
    %81 = vector.shape_cast %80 : vector<1x8xf32> to vector<1x8x1xf32>
    %82 = tpu.reciprocal %81 {approx = true} : vector<1x8x1xf32> -> vector<1x8x1xf32>
    %83 = vector.broadcast %82 : vector<1x8x1xf32> to vector<1x8x8xf32>
    %84 = arith.mulf %79, %83 : vector<1x8x8xf32>
    %85 = arith.truncf %84 : vector<1x8x8xf32> to vector<1x8x8xbf16>
    "tpu.trace_start"() <{level = 10 : i32, message = "bqk,bkd->bqd"}> : () -> ()
    %cst_22 = arith.constant dense<0.000000e+00> : vector<1x8x32xf32>
    %86 = tpu.matmul %85, %73, %cst_22 {dimension_numbers = #tpu.dot_dimension_numbers<[2], [1], [1], [2], [0, 0, 0, 1, 1, 2], [0], [0]>} : vector<1x8x8xbf16>, vector<1x8x32xbf16>, vector<1x8x32xf32> -> vector<1x8x32xf32>
    "tpu.trace_stop"() : () -> ()
    %87 = vector.shape_cast %86 : vector<1x8x32xf32> to vector<8x32xf32>
    %88 = arith.truncf %87 : vector<8x32xf32> to vector<8x32xbf16>
    %89 = vector.extract_strided_slice %42 {offsets = [32, 0], sizes = [32, 128], strides = [1, 1]} : vector<128x128xbf16> to vector<32x128xbf16>
    %cst_23 = arith.constant dense<0.000000e+00> : vector<8x128xf32>
    %90 = tpu.matmul %88, %89, %cst_23 {dimension_numbers = #tpu.dot_dimension_numbers<[1], [0], [0], [1], [0, 0, 1, 1], [], []>} : vector<8x32xbf16>, vector<32x128xbf16>, vector<8x128xf32> -> vector<8x128xf32>
    %91 = arith.addf %67, %90 : vector<8x128xf32>
    %92 = vector.extract_strided_slice %41 {offsets = [0, 64], sizes = [8, 32], strides = [1, 1]} : vector<8x384xbf16> to vector<8x32xbf16>
    %93 = vector.shape_cast %92 : vector<8x32xbf16> to vector<1x8x32xbf16>
    %94 = vector.extract_strided_slice %41 {offsets = [0, 192], sizes = [8, 32], strides = [1, 1]} : vector<8x384xbf16> to vector<8x32xbf16>
    %95 = vector.shape_cast %94 : vector<8x32xbf16> to vector<1x8x32xbf16>
    %96 = vector.extract_strided_slice %41 {offsets = [0, 320], sizes = [8, 32], strides = [1, 1]} : vector<8x384xbf16> to vector<8x32xbf16>
    %97 = vector.shape_cast %96 : vector<8x32xbf16> to vector<1x8x32xbf16>
    "tpu.trace_start"() <{level = 10 : i32, message = "bqd,bkd->bqk"}> : () -> ()
    %cst_24 = arith.constant dense<0.000000e+00> : vector<1x8x8xf32>
    %98 = tpu.matmul %93, %95, %cst_24 {dimension_numbers = #tpu.dot_dimension_numbers<[2], [2], [1], [1], [0, 0, 0, 1, 1, 1], [0], [0]>} : vector<1x8x32xbf16>, vector<1x8x32xbf16>, vector<1x8x8xf32> -> vector<1x8x8xf32>
    "tpu.trace_stop"() : () -> ()
    %cst_25 = arith.constant dense<0xFF800000> : vector<1x8xf32>
    %99 = vector.multi_reduction <maximumf>, %98, %cst_25 [2] : vector<1x8x8xf32> to vector<1x8xf32>
    %100 = vector.shape_cast %99 : vector<1x8xf32> to vector<1x8x1xf32>
    %101 = vector.broadcast %100 : vector<1x8x1xf32> to vector<1x8x8xf32>
    %102 = arith.subf %98, %101 : vector<1x8x8xf32>
    %103 = math.exp %102 : vector<1x8x8xf32>
    %cst_26 = arith.constant dense<0.000000e+00> : vector<1x8xf32>
    %104 = vector.multi_reduction <add>, %103, %cst_26 [2] : vector<1x8x8xf32> to vector<1x8xf32>
    %105 = vector.shape_cast %104 : vector<1x8xf32> to vector<1x8x1xf32>
    %106 = tpu.reciprocal %105 {approx = true} : vector<1x8x1xf32> -> vector<1x8x1xf32>
    %107 = vector.broadcast %106 : vector<1x8x1xf32> to vector<1x8x8xf32>
    %108 = arith.mulf %103, %107 : vector<1x8x8xf32>
    %109 = arith.truncf %108 : vector<1x8x8xf32> to vector<1x8x8xbf16>
    "tpu.trace_start"() <{level = 10 : i32, message = "bqk,bkd->bqd"}> : () -> ()
    %cst_27 = arith.constant dense<0.000000e+00> : vector<1x8x32xf32>
    %110 = tpu.matmul %109, %97, %cst_27 {dimension_numbers = #tpu.dot_dimension_numbers<[2], [1], [1], [2], [0, 0, 0, 1, 1, 2], [0], [0]>} : vector<1x8x8xbf16>, vector<1x8x32xbf16>, vector<1x8x32xf32> -> vector<1x8x32xf32>
    "tpu.trace_stop"() : () -> ()
    %111 = vector.shape_cast %110 : vector<1x8x32xf32> to vector<8x32xf32>
    %112 = arith.truncf %111 : vector<8x32xf32> to vector<8x32xbf16>
    %113 = vector.extract_strided_slice %42 {offsets = [64, 0], sizes = [32, 128], strides = [1, 1]} : vector<128x128xbf16> to vector<32x128xbf16>
    %cst_28 = arith.constant dense<0.000000e+00> : vector<8x128xf32>
    %114 = tpu.matmul %112, %113, %cst_28 {dimension_numbers = #tpu.dot_dimension_numbers<[1], [0], [0], [1], [0, 0, 1, 1], [], []>} : vector<8x32xbf16>, vector<32x128xbf16>, vector<8x128xf32> -> vector<8x128xf32>
    %115 = arith.addf %91, %114 : vector<8x128xf32>
    %116 = vector.extract_strided_slice %41 {offsets = [0, 96], sizes = [8, 32], strides = [1, 1]} : vector<8x384xbf16> to vector<8x32xbf16>
    %117 = vector.shape_cast %116 : vector<8x32xbf16> to vector<1x8x32xbf16>
    %118 = vector.extract_strided_slice %41 {offsets = [0, 224], sizes = [8, 32], strides = [1, 1]} : vector<8x384xbf16> to vector<8x32xbf16>
    %119 = vector.shape_cast %118 : vector<8x32xbf16> to vector<1x8x32xbf16>
    %120 = vector.extract_strided_slice %41 {offsets = [0, 352], sizes = [8, 32], strides = [1, 1]} : vector<8x384xbf16> to vector<8x32xbf16>
    %121 = vector.shape_cast %120 : vector<8x32xbf16> to vector<1x8x32xbf16>
    "tpu.trace_start"() <{level = 10 : i32, message = "bqd,bkd->bqk"}> : () -> ()
    %cst_29 = arith.constant dense<0.000000e+00> : vector<1x8x8xf32>
    %122 = tpu.matmul %117, %119, %cst_29 {dimension_numbers = #tpu.dot_dimension_numbers<[2], [2], [1], [1], [0, 0, 0, 1, 1, 1], [0], [0]>} : vector<1x8x32xbf16>, vector<1x8x32xbf16>, vector<1x8x8xf32> -> vector<1x8x8xf32>
    "tpu.trace_stop"() : () -> ()
    %cst_30 = arith.constant dense<0xFF800000> : vector<1x8xf32>
    %123 = vector.multi_reduction <maximumf>, %122, %cst_30 [2] : vector<1x8x8xf32> to vector<1x8xf32>
    %124 = vector.shape_cast %123 : vector<1x8xf32> to vector<1x8x1xf32>
    %125 = vector.broadcast %124 : vector<1x8x1xf32> to vector<1x8x8xf32>
    %126 = arith.subf %122, %125 : vector<1x8x8xf32>
    %127 = math.exp %126 : vector<1x8x8xf32>
    %cst_31 = arith.constant dense<0.000000e+00> : vector<1x8xf32>
    %128 = vector.multi_reduction <add>, %127, %cst_31 [2] : vector<1x8x8xf32> to vector<1x8xf32>
    %129 = vector.shape_cast %128 : vector<1x8xf32> to vector<1x8x1xf32>
    %130 = tpu.reciprocal %129 {approx = true} : vector<1x8x1xf32> -> vector<1x8x1xf32>
    %131 = vector.broadcast %130 : vector<1x8x1xf32> to vector<1x8x8xf32>
    %132 = arith.mulf %127, %131 : vector<1x8x8xf32>
    %133 = arith.truncf %132 : vector<1x8x8xf32> to vector<1x8x8xbf16>
    "tpu.trace_start"() <{level = 10 : i32, message = "bqk,bkd->bqd"}> : () -> ()
    %cst_32 = arith.constant dense<0.000000e+00> : vector<1x8x32xf32>
    %134 = tpu.matmul %133, %121, %cst_32 {dimension_numbers = #tpu.dot_dimension_numbers<[2], [1], [1], [2], [0, 0, 0, 1, 1, 2], [0], [0]>} : vector<1x8x8xbf16>, vector<1x8x32xbf16>, vector<1x8x32xf32> -> vector<1x8x32xf32>
    "tpu.trace_stop"() : () -> ()
    %135 = vector.shape_cast %134 : vector<1x8x32xf32> to vector<8x32xf32>
    %136 = arith.truncf %135 : vector<8x32xf32> to vector<8x32xbf16>
    %137 = vector.extract_strided_slice %42 {offsets = [96, 0], sizes = [32, 128], strides = [1, 1]} : vector<128x128xbf16> to vector<32x128xbf16>
    %cst_33 = arith.constant dense<0.000000e+00> : vector<8x128xf32>
    %138 = tpu.matmul %136, %137, %cst_33 {dimension_numbers = #tpu.dot_dimension_numbers<[1], [0], [0], [1], [0, 0, 1, 1], [], []>} : vector<8x32xbf16>, vector<32x128xbf16>, vector<8x128xf32> -> vector<8x128xf32>
    %139 = arith.addf %115, %138 : vector<8x128xf32>
    %140 = arith.addf %0, %139 : vector<8x128xf32>
    %141 = vector.broadcast %5 : vector<1x128xf32> to vector<8x128xf32>
    %142 = arith.addf %140, %141 : vector<8x128xf32>
    %cst_34 = arith.constant dense<0.000000e+00> : vector<8xf32>
    %143 = vector.multi_reduction <add>, %142, %cst_34 [1] : vector<8x128xf32> to vector<8xf32>
    %144 = vector.shape_cast %143 : vector<8xf32> to vector<8x1xf32>
    %cst_35 = arith.constant 1.280000e+02 : f32
    %145 = vector.broadcast %cst_35 : f32 to vector<8x1xf32>
    %146 = arith.divf %144, %145 : vector<8x1xf32>
    %147 = arith.mulf %142, %142 : vector<8x128xf32>
    %cst_36 = arith.constant dense<0.000000e+00> : vector<8xf32>
    %148 = vector.multi_reduction <add>, %147, %cst_36 [1] : vector<8x128xf32> to vector<8xf32>
    %149 = vector.shape_cast %148 : vector<8xf32> to vector<8x1xf32>
    %cst_37 = arith.constant 1.280000e+02 : f32
    %150 = vector.broadcast %cst_37 : f32 to vector<8x1xf32>
    %151 = arith.divf %149, %150 : vector<8x1xf32>
    %152 = arith.mulf %146, %146 : vector<8x1xf32>
    %153 = arith.subf %151, %152 : vector<8x1xf32>
    %cst_38 = arith.constant 0.000000e+00 : f32
    %154 = vector.broadcast %cst_38 : f32 to vector<8x1xf32>
    %155 = arith.maximumf %153, %154 : vector<8x1xf32>
    %156 = vector.broadcast %146 : vector<8x1xf32> to vector<8x128xf32>
    %157 = arith.subf %142, %156 : vector<8x128xf32>
    %cst_39 = arith.constant 9.99999974E-6 : f32
    %158 = vector.broadcast %cst_39 : f32 to vector<8x1xf32>
    %159 = arith.addf %155, %158 : vector<8x1xf32>
    %160 = math.rsqrt %159 : vector<8x1xf32>
    %161 = vector.broadcast %160 : vector<8x1xf32> to vector<8x128xf32>
    %162 = arith.mulf %157, %161 : vector<8x128xf32>
    %163 = vector.broadcast %6 : vector<1x128xf32> to vector<8x128xf32>
    %164 = arith.mulf %162, %163 : vector<8x128xf32>
    %165 = vector.broadcast %7 : vector<1x128xf32> to vector<8x128xf32>
    %166 = arith.addf %164, %165 : vector<8x128xf32>
    %167 = arith.truncf %166 : vector<8x128xf32> to vector<8x128xbf16>
    %c0_40 = arith.constant 0 : index
    %c0_41 = arith.constant 0 : index
    %168 = vector.load %arg5[%c0_40, %c0_41] : memref<128x256xbf16, #tpu.memory_space<vmem>>, vector<128x256xbf16>
    %cst_42 = arith.constant dense<0.000000e+00> : vector<8x256xf32>
    %169 = tpu.matmul %167, %168, %cst_42 {dimension_numbers = #tpu.dot_dimension_numbers<[1], [0], [0], [1], [0, 0, 1, 1], [], []>} : vector<8x128xbf16>, vector<128x256xbf16>, vector<8x256xf32> -> vector<8x256xf32>
    %170 = vector.broadcast %9 : vector<1x256xf32> to vector<8x256xf32>
    %171 = arith.addf %169, %170 : vector<8x256xf32>
    %cst_43 = arith.constant dense<0.000000e+00> : vector<8xf32>
    %172 = vector.multi_reduction <add>, %171, %cst_43 [1] : vector<8x256xf32> to vector<8xf32>
    %173 = vector.shape_cast %172 : vector<8xf32> to vector<8x1xf32>
    %cst_44 = arith.constant 2.560000e+02 : f32
    %174 = vector.broadcast %cst_44 : f32 to vector<8x1xf32>
    %175 = arith.divf %173, %174 : vector<8x1xf32>
    %176 = arith.mulf %171, %171 : vector<8x256xf32>
    %cst_45 = arith.constant dense<0.000000e+00> : vector<8xf32>
    %177 = vector.multi_reduction <add>, %176, %cst_45 [1] : vector<8x256xf32> to vector<8xf32>
    %178 = vector.shape_cast %177 : vector<8xf32> to vector<8x1xf32>
    %cst_46 = arith.constant 2.560000e+02 : f32
    %179 = vector.broadcast %cst_46 : f32 to vector<8x1xf32>
    %180 = arith.divf %178, %179 : vector<8x1xf32>
    %181 = arith.mulf %175, %175 : vector<8x1xf32>
    %182 = arith.subf %180, %181 : vector<8x1xf32>
    %cst_47 = arith.constant 0.000000e+00 : f32
    %183 = vector.broadcast %cst_47 : f32 to vector<8x1xf32>
    %184 = arith.maximumf %182, %183 : vector<8x1xf32>
    %185 = vector.broadcast %175 : vector<8x1xf32> to vector<8x256xf32>
    %186 = arith.subf %171, %185 : vector<8x256xf32>
    %cst_48 = arith.constant 9.99999974E-6 : f32
    %187 = vector.broadcast %cst_48 : f32 to vector<8x1xf32>
    %188 = arith.addf %184, %187 : vector<8x1xf32>
    %189 = math.rsqrt %188 : vector<8x1xf32>
    %190 = vector.broadcast %189 : vector<8x1xf32> to vector<8x256xf32>
    %191 = arith.mulf %186, %190 : vector<8x256xf32>
    %192 = vector.broadcast %10 : vector<1x256xf32> to vector<8x256xf32>
    %193 = arith.mulf %191, %192 : vector<8x256xf32>
    %194 = vector.broadcast %11 : vector<1x256xf32> to vector<8x256xf32>
    %195 = arith.addf %193, %194 : vector<8x256xf32>
    %cst_49 = arith.constant 0.000000e+00 : f32
    %196 = vector.broadcast %cst_49 : f32 to vector<8x256xf32>
    %197 = arith.cmpf ogt, %195, %196 : vector<8x256xf32>
    %cst_50 = arith.constant 0.000000e+00 : f32
    %198 = vector.broadcast %cst_50 : f32 to vector<8x256xf32>
    %199 = arith.minimumf %195, %198 : vector<8x256xf32>
    %200 = math.exp %199 : vector<8x256xf32>
    %cst_51 = arith.constant 1.000000e+00 : f32
    %201 = vector.broadcast %cst_51 : f32 to vector<8x256xf32>
    %202 = arith.subf %200, %201 : vector<8x256xf32>
    %203 = arith.select %197, %195, %202 : vector<8x256xi1>, vector<8x256xf32>
    %204 = arith.truncf %203 : vector<8x256xf32> to vector<8x256xbf16>
    %c0_52 = arith.constant 0 : index
    %c0_53 = arith.constant 0 : index
    %205 = vector.load %arg6[%c0_52, %c0_53] : memref<256x128xbf16, #tpu.memory_space<vmem>>, vector<256x128xbf16>
    %cst_54 = arith.constant dense<0.000000e+00> : vector<8x128xf32>
    %206 = tpu.matmul %204, %205, %cst_54 {dimension_numbers = #tpu.dot_dimension_numbers<[1], [0], [0], [1], [0, 0, 1, 1], [], []>} : vector<8x256xbf16>, vector<256x128xbf16>, vector<8x128xf32> -> vector<8x128xf32>
    %207 = vector.broadcast %8 : vector<1x128xf32> to vector<8x128xf32>
    %208 = arith.addf %206, %207 : vector<8x128xf32>
    %209 = arith.addf %142, %208 : vector<8x128xf32>
    %c0_55 = arith.constant 0 : index
    %c0_56 = arith.constant 0 : index
    %210 = vector.load %arg7[%c0_55, %c0_56] : memref<8x128xf32, #tpu.memory_space<vmem>>, vector<8x128xf32>
    tpu.vector_store %arg7[%c0_55, %c0_56], %209 {strides = array<i32>} : memref<8x128xf32, #tpu.memory_space<vmem>>, vector<8x128xf32>,
    return
  }
  func.func @transform_0(%arg0: i32) -> (i32, i32) {
    %c0_i32 = arith.constant 0 : i32
    %c0_i32_0 = arith.constant 0 : i32
    return %arg0, %c0_i32 : i32, i32
  }
  func.func @transform_1(%arg0: i32) -> (i32, i32) {
    %c0_i32 = arith.constant 0 : i32
    %c0_i32_0 = arith.constant 0 : i32
    %c0_i32_1 = arith.constant 0 : i32
    return %c0_i32, %c0_i32_0 : i32, i32
  }
  func.func @transform_2(%arg0: i32) -> (i32, i32) {
    %c0_i32 = arith.constant 0 : i32
    %c0_i32_0 = arith.constant 0 : i32
    %c0_i32_1 = arith.constant 0 : i32
    return %c0_i32, %c0_i32_0 : i32, i32
  }
  func.func @transform_3(%arg0: i32) -> (i32, i32) {
    %c0_i32 = arith.constant 0 : i32
    %c0_i32_0 = arith.constant 0 : i32
    %c0_i32_1 = arith.constant 0 : i32
    return %c0_i32, %c0_i32_0 : i32, i32
  }
  func.func @transform_4(%arg0: i32) -> (i32, i32) {
    %c0_i32 = arith.constant 0 : i32
    %c0_i32_0 = arith.constant 0 : i32
    %c0_i32_1 = arith.constant 0 : i32
    return %c0_i32, %c0_i32_0 : i32, i32
  }
  func.func @transform_5(%arg0: i32) -> (i32, i32) {
    %c0_i32 = arith.constant 0 : i32
    %c0_i32_0 = arith.constant 0 : i32
    %c0_i32_1 = arith.constant 0 : i32
    return %c0_i32, %c0_i32_0 : i32, i32
  }
  func.func @transform_6(%arg0: i32) -> (i32, i32) {
    %c0_i32 = arith.constant 0 : i32
    %c0_i32_0 = arith.constant 0 : i32
    return %arg0, %c0_i32 : i32, i32
  }
}

</mosaic_0001>

<llo_original>
// kernel: tpu_custom_call.1
$region0: #{tpu_custom_call.1}
  #allocation0 [shape = 'u32[]', space=smem, size = 0x4, offset = 0x4, fixed_abs, tag = 'smem constant byte address 0x4 - core index']
  #allocation1 [shape = 'u32[72,128]{1,0:T(1,128)}', space=vmem, size = 0x9000, scoped, tag = 'internal scratch']
  %s0 = inlined_call_operand.hbm [shape: f32[16,128], index: 0, kind: input, shape index: {}]
  %s1 = inlined_call_operand.hbm [shape: f32[8,384], index: 1, kind: input, shape index: {}]
  %s2 = inlined_call_operand.hbm [shape: bf16[128,384], index: 2, kind: input, shape index: {}]
  %s3 = inlined_call_operand.hbm [shape: bf16[128,128], index: 3, kind: input, shape index: {}]
  %s4 = inlined_call_operand.hbm [shape: bf16[128,256], index: 4, kind: input, shape index: {}]
  %s5 = inlined_call_operand.hbm [shape: bf16[256,128], index: 5, kind: input, shape index: {}]
  %s6 = inlined_call_operand.hbm [shape: f32[16,128], index: 6, kind: output, shape index: {}]
  %s7 = sld [smem:[#allocation0]]
  $region81: #{tpu_custom_call.1} parent=0
    _
  %s9 = ssub.s32 1, %s7
  %s10 = scalar_select 0, %s9, %s7
  $region1: #{tpu_custom_call.1} parent=0
    #allocation2 [shape = 'u8[8192]{0}', space=vmem, size = 0x2000, scoped, tag = 'input window, operand 0']
    #allocation3 [shape = 's32[2]{0}', space=sflag, size = 0x8, scoped, tag = 'scoped memory for tpu_custom_call.1']
    #allocation4 [shape = 's32[2]{0}', space=sflag, size = 0x8, scoped, tag = 'scoped memory for tpu_custom_call.1']
    #allocation5 [shape = 'u8[12288]{0}', space=vmem, size = 0x3000, scoped, tag = 'input window, operand 1, single buffered']
    #allocation6 [shape = 's32[1]{0}', space=sflag, size = 0x4, scoped, tag = 'scoped memory for tpu_custom_call.1']
    #allocation7 [shape = 'u8[98304]{0}', space=vmem, size = 0x18000, scoped, tag = 'input window, operand 2, single buffered']
    #allocation8 [shape = 'u8[32768]{0}', space=vmem, size = 0x8000, scoped, tag = 'input window, operand 3, single buffered']
    #allocation9 [shape = 's32[1]{0}', space=sflag, size = 0x4, scoped, tag = 'scoped memory for tpu_custom_call.1']
    #allocation10 [shape = 'u8[65536]{0}', space=vmem, size = 0x10000, scoped, tag = 'input window, operand 4, single buffered']
    #allocation11 [shape = 'u8[65536]{0}', space=vmem, size = 0x10000, scoped, tag = 'input window, operand 5, single buffered']
    #allocation12 [shape = 's32[1]{0}', space=sflag, size = 0x4, scoped, tag = 'scoped memory for tpu_custom_call.1']
    #allocation13 [shape = 'u8[8192]{0}', space=vmem, size = 0x2000, scoped, tag = 'output window, operand 0']
    %11 = vsyncpa [#allocation3], 0
    %s12 = scalar_lea.sflag [#allocation3], 1
    %13 = vsyncpa %s12, 0
    %14 = vsyncpa [#allocation6], 0
    %15 = vsyncpa [#allocation9], 0
    %16 = vsyncpa [#allocation12], 0
    %17 = vsyncpa [#allocation4], 0
    %s18 = scalar_lea.sflag [#allocation4], 1
    %19 = vsyncpa %s18, 0
    loop: start=0, step=1, limit=4
    $region2: #{tpu_custom_call.1} parent=1 // loop_pre_header
      _
    $region3: #{tpu_custom_call.1} parent=1 // loop_header
      %s21 = sphi 0, %s25
      %p22 = scmp.ge.s32.totalorder %s21, 4
      %s31 = sphi 0, %s33
      %s34 = sphi 0, %s31
      %s35 = sphi 0, %s34
      %s51 = sphi 0, %s35
      %s55 = sphi 0, %s55
      %s57 = sphi 0, %s55
      %s58 = sphi 0, %s57
      %s72 = sphi 0, %s58
      %s76 = sphi 0, %s76
      %s78 = sphi 0, %s76
      %s79 = sphi 0, %s78
      %s93 = sphi 0, %s79
      %s97 = sphi 0, %s97
      %s99 = sphi 0, %s97
      %s100 = sphi 0, %s99
      %s114 = sphi 0, %s100
      %s118 = sphi 0, %s118
      %s120 = sphi 0, %s118
      %s121 = sphi 0, %s120
      %s135 = sphi 0, %s121
      %s139 = sphi 0, %s139
      %s141 = sphi 0, %s139
      %s142 = sphi 0, %s141
      %s156 = sphi 0, %s142
      %s162 = sphi 0, %s164
      %s165 = sphi 0, %s162
      %s166 = sphi 0, %s165
      %s182 = sphi 0, %s166
    $region4: #{tpu_custom_call.1} parent=1 // loop_header_branch
      %24 = sbr.rel (%p22) target = $region8
    $region5: #{tpu_custom_call.1} parent=1 // loop_body
      %s26 = ssub.s32 %s21, 1
      %s27 = ssub.s32 %s21, 2
      %s28 = sadd.s32 %s21, 1
      %s29 = ssub.s32 %s21, %s28
      %p30 = scmp.eq.s32.totalorder %s29, 0
      %s32 = sadd.s32 %s31, 1
      %s33 = scalar_select %p30, %s31, %s32
      %p36 = pneg %p30
      %p37 = scmp.eq.s32.totalorder %s21, 1
      %p38 = por %p36, %p37
      %p39 = scmp.ne.s32.totalorder %s31, %s34
      %p40 = scmp.eq.s32.totalorder %s21, 0
      %p41 = por %p39, %p40
      %p42 = scmp.ne.s32.totalorder %s31, %s34
      %p43 = scmp.eq.s32.totalorder %s26, 1
      %p44 = por %p42, %p43
      %p45 = scmp.ne.s32.totalorder %s34, %s35
      %p46 = scmp.eq.s32.totalorder %s26, 0
      %p47 = por %p45, %p46
      %p48 = scmp.ne.s32.totalorder %s34, %s35
      %p49 = scmp.eq.s32.totalorder %s27, 1
      %p50 = por %p48, %p49
      %p52 = scmp.ne.s32.totalorder %s35, %s51
      %p53 = scmp.eq.s32.totalorder %s27, 0
      %p54 = por %p52, %p53
      %s56 = sadd.s32 %s55, 1
      %p59 = scmp.eq.s32.totalorder %s21, 1
      %p60 = scmp.ne.s32.totalorder %s55, %s57
      %p61 = scmp.eq.s32.totalorder %s21, 0
      %p62 = por %p60, %p61
      %p63 = scmp.ne.s32.totalorder %s55, %s57
      %p64 = scmp.eq.s32.totalorder %s26, 1
      %p65 = por %p63, %p64
      %p66 = scmp.ne.s32.totalorder %s57, %s58
      %p67 = scmp.eq.s32.totalorder %s26, 0
      %p68 = por %p66, %p67
      %p69 = scmp.ne.s32.totalorder %s57, %s58
      %p70 = scmp.eq.s32.totalorder %s27, 1
      %p71 = por %p69, %p70
      %p73 = scmp.ne.s32.totalorder %s58, %s72
      %p74 = scmp.eq.s32.totalorder %s27, 0
      %p75 = por %p73, %p74
      %s77 = sadd.s32 %s76, 1
      %p80 = scmp.eq.s32.totalorder %s21, 1
      %p81 = scmp.ne.s32.totalorder %s76, %s78
      %p82 = scmp.eq.s32.totalorder %s21, 0
      %p83 = por %p81, %p82
      %p84 = scmp.ne.s32.totalorder %s76, %s78
      %p85 = scmp.eq.s32.totalorder %s26, 1
      %p86 = por %p84, %p85
      %p87 = scmp.ne.s32.totalorder %s78, %s79
      %p88 = scmp.eq.s32.totalorder %s26, 0
      %p89 = por %p87, %p88
      %p90 = scmp.ne.s32.totalorder %s78, %s79
      %p91 = scmp.eq.s32.totalorder %s27, 1
      %p92 = por %p90, %p91
      %p94 = scmp.ne.s32.totalorder %s79, %s93
      %p95 = scmp.eq.s32.totalorder %s27, 0
      %p96 = por %p94, %p95
      %s98 = sadd.s32 %s97, 1
      %p101 = scmp.eq.s32.totalorder %s21, 1
      %p102 = scmp.ne.s32.totalorder %s97, %s99
      %p103 = scmp.eq.s32.totalorder %s21, 0
      %p104 = por %p102, %p103
      %p105 = scmp.ne.s32.totalorder %s97, %s99
      %p106 = scmp.eq.s32.totalorder %s26, 1
      %p107 = por %p105, %p106
      %p108 = scmp.ne.s32.totalorder %s99, %s100
      %p109 = scmp.eq.s32.totalorder %s26, 0
      %p110 = por %p108, %p109
      %p111 = scmp.ne.s32.totalorder %s99, %s100
      %p112 = scmp.eq.s32.totalorder %s27, 1
      %p113 = por %p111, %p112
      %p115 = scmp.ne.s32.totalorder %s100, %s114
      %p116 = scmp.eq.s32.totalorder %s27, 0
      %p117 = por %p115, %p116
      %s119 = sadd.s32 %s118, 1
      %p122 = scmp.eq.s32.totalorder %s21, 1
      %p123 = scmp.ne.s32.totalorder %s118, %s120
      %p124 = scmp.eq.s32.totalorder %s21, 0
      %p125 = por %p123, %p124
      %p126 = scmp.ne.s32.totalorder %s118, %s120
      %p127 = scmp.eq.s32.totalorder %s26, 1
      %p128 = por %p126, %p127
      %p129 = scmp.ne.s32.totalorder %s120, %s121
      %p130 = scmp.eq.s32.totalorder %s26, 0
      %p131 = por %p129, %p130
      %p132 = scmp.ne.s32.totalorder %s120, %s121
      %p133 = scmp.eq.s32.totalorder %s27, 1
      %p134 = por %p132, %p133
      %p136 = scmp.ne.s32.totalorder %s121, %s135
      %p137 = scmp.eq.s32.totalorder %s27, 0
      %p138 = por %p136, %p137
      %s140 = sadd.s32 %s139, 1
      %p143 = scmp.eq.s32.totalorder %s21, 1
      %p144 = scmp.ne.s32.totalorder %s139, %s141
      %p145 = scmp.eq.s32.totalorder %s21, 0
      %p146 = por %p144, %p145
      %p147 = scmp.ne.s32.totalorder %s139, %s141
      %p148 = scmp.eq.s32.totalorder %s26, 1
      %p149 = por %p147, %p148
      %p150 = scmp.ne.s32.totalorder %s141, %s142
      %p151 = scmp.eq.s32.totalorder %s26, 0
      %p152 = por %p150, %p151
      %p153 = scmp.ne.s32.totalorder %s141, %s142
      %p154 = scmp.eq.s32.totalorder %s27, 1
      %p155 = por %p153, %p154
      %p157 = scmp.ne.s32.totalorder %s142, %s156
      %p158 = scmp.eq.s32.totalorder %s27, 0
      %p159 = por %p157, %p158
      %s160 = ssub.s32 %s21, %s28
      %p161 = scmp.eq.s32.totalorder %s160, 0
      %s163 = sadd.s32 %s162, 1
      %s164 = scalar_select %p161, %s162, %s163
      %p167 = pneg %p161
      %p168 = scmp.eq.s32.totalorder %s21, 1
      %p169 = por %p167, %p168
      %p170 = scmp.ne.s32.totalorder %s162, %s165
      %p171 = scmp.eq.s32.totalorder %s21, 0
      %p172 = por %p170, %p171
      %p173 = scmp.ne.s32.totalorder %s162, %s165
      %p174 = scmp.eq.s32.totalorder %s26, 1
      %p175 = por %p173, %p174
      %p176 = scmp.ne.s32.totalorder %s165, %s166
      %p177 = scmp.eq.s32.totalorder %s26, 0
      %p178 = por %p176, %p177
      %p179 = scmp.ne.s32.totalorder %s165, %s166
      %p180 = scmp.eq.s32.totalorder %s27, 1
      %p181 = por %p179, %p180
      %p183 = scmp.ne.s32.totalorder %s166, %s182
      %p184 = scmp.eq.s32.totalorder %s27, 0
      %p185 = por %p183, %p184
      %p186 = scmp.le.s32.totalorder 1, %s21
      %p187 = scmp.lt.s32.totalorder %s21, 3
      %p188 = pnand %p186, %p187
      %p189 = pneg %p188
      // Predicated region
      $region9: #{tpu_custom_call.1} parent=5 // pred_check
        _
      $region10: #{tpu_custom_call.1} parent=5 // pred_check_branch
        %191 = sbr.rel (%p188) target = $region12
      $region11: #{tpu_custom_call.1} parent=5 // pred_region
        %s192 = ssub.s32 %s21, 1
        // Predicated region
        $region13: #{tpu_custom_call.1} parent=11 // pred_check
          %p193 = pneg %p68
        $region14: #{tpu_custom_call.1} parent=11 // pred_check_branch
          %195 = sbr.rel (%p193) target = $region16
        $region15: #{tpu_custom_call.1} parent=11 // pred_region
          %197 = vsyncadd [#allocation6], 0
          %s199 = sshll.u32 %s1, 4
          %s200 = int_to_ptr.hbm [resolvable:$true] %s199
          %s201 = sshll.u32 [#allocation5], 4
          %s202 = int_to_ptr.vmem [resolvable:$true] %s201
          %204 = dma.hbm_to_vmem [thread:$0]  %s200, 384, %s202, [#allocation6]
        $region16: #{tpu_custom_call.1} parent=11 // pred_fallthru
          _
        // Predicated region
        $region17: #{tpu_custom_call.1} parent=11 // pred_check
          %p205 = pneg %p89
        $region18: #{tpu_custom_call.1} parent=11 // pred_check_branch
          %207 = sbr.rel (%p205) target = $region20
        $region19: #{tpu_custom_call.1} parent=11 // pred_region
          %209 = vsyncadd [#allocation6], 0
          %s210 = sshll.u32 %s2, 4
          %s211 = int_to_ptr.hbm [resolvable:$true] %s210
          %s212 = sshll.u32 [#allocation7], 4
          %s213 = int_to_ptr.vmem [resolvable:$true] %s212
          %218 = dma.hbm_to_vmem [thread:$0]  %s211, 3072, %s213, [#allocation6], 192, 192, 12
        $region20: #{tpu_custom_call.1} parent=11 // pred_fallthru
          _
        // Predicated region
        $region21: #{tpu_custom_call.1} parent=11 // pred_check
          %p219 = pneg %p110
        $region22: #{tpu_custom_call.1} parent=11 // pred_check_branch
          %221 = sbr.rel (%p219) target = $region24
        $region23: #{tpu_custom_call.1} parent=11 // pred_region
          %223 = vsyncadd [#allocation9], 0
          %s224 = sshll.u32 %s3, 4
          %s225 = int_to_ptr.hbm [resolvable:$true] %s224
          %s226 = sshll.u32 [#allocation8], 4
          %s227 = int_to_ptr.vmem [resolvable:$true] %s226
          %232 = dma.hbm_to_vmem [thread:$0]  %s225, 1024, %s227, [#allocation9], 64, 64, 4
        $region24: #{tpu_custom_call.1} parent=11 // pred_fallthru
          _
        // Predicated region
        $region25: #{tpu_custom_call.1} parent=11 // pred_check
          %p233 = pneg %p131
        $region26: #{tpu_custom_call.1} parent=11 // pred_check_branch
          %235 = sbr.rel (%p233) target = $region28
        $region27: #{tpu_custom_call.1} parent=11 // pred_region
          %237 = vsyncadd [#allocation9], 0
          %s238 = sshll.u32 %s4, 4
          %s239 = int_to_ptr.hbm [resolvable:$true] %s238
          %s240 = sshll.u32 [#allocation10], 4
          %s241 = int_to_ptr.vmem [resolvable:$true] %s240
          %246 = dma.hbm_to_vmem [thread:$0]  %s239, 2048, %s241, [#allocation9], 128, 128, 8
        $region28: #{tpu_custom_call.1} parent=11 // pred_fallthru
          _
        // Predicated region
        $region29: #{tpu_custom_call.1} parent=11 // pred_check
          %p247 = pneg %p152
        $region30: #{tpu_custom_call.1} parent=11 // pred_check_branch
          %249 = sbr.rel (%p247) target = $region32
        $region31: #{tpu_custom_call.1} parent=11 // pred_region
          %251 = vsyncadd [#allocation12], 0
          %s252 = sshll.u32 %s5, 4
          %s253 = int_to_ptr.hbm [resolvable:$true] %s252
          %s254 = sshll.u32 [#allocation11], 4
          %s255 = int_to_ptr.vmem [resolvable:$true] %s254
          %260 = dma.hbm_to_vmem [thread:$0]  %s253, 2048, %s255, [#allocation12], 64, 64, 4
        $region32: #{tpu_custom_call.1} parent=11 // pred_fallthru
          _
      $region12: #{tpu_custom_call.1} parent=5 // pred_fallthru
        _
      %p261 = scmp.lt.s32.totalorder %s21, 2
      // Predicated region
      $region33: #{tpu_custom_call.1} parent=5 // pred_check
        %p262 = pneg %p261
      $region34: #{tpu_custom_call.1} parent=5 // pred_check_branch
        %264 = sbr.rel (%p262) target = $region36
      $region35: #{tpu_custom_call.1} parent=5 // pred_region
        // Predicated region
        $region37: #{tpu_custom_call.1} parent=35 // pred_check
          %p265 = pneg %p41
        $region38: #{tpu_custom_call.1} parent=35 // pred_check_branch
          %267 = sbr.rel (%p265) target = $region40
        $region39: #{tpu_custom_call.1} parent=35 // pred_region
          %s268 = sand.u32 %s31, 1
          %s269 = scalar_lea.sflag [#allocation3], %s268
          %s270 = sand.u32 %s31, 1
          %s271 = smul.addr %s270, 8
          %s272 = scalar_lea.vmem [#allocation2], %s271
          %274 = vsyncadd %s269, 0
          %s275 = smul.addr %s21, 8
          %s276 = scalar_lea.hbm %s0, %s275
          %s278 = sshll.u32 %s276, 4
          %s279 = int_to_ptr.hbm [resolvable:$true] %s278
          %s280 = sshll.u32 %s272, 4
          %s281 = int_to_ptr.vmem [resolvable:$true] %s280
          %283 = dma.hbm_to_vmem [thread:$0]  %s279, 128, %s281, %s269
        $region40: #{tpu_custom_call.1} parent=35 // pred_fallthru
          _
      $region36: #{tpu_custom_call.1} parent=5 // pred_fallthru
        _
      %p284 = scmp.le.s32.totalorder 1, %s21
      %p285 = scmp.lt.s32.totalorder %s21, 3
      %p286 = pnand %p284, %p285
      %p287 = pneg %p286
      // Predicated region
      $region41: #{tpu_custom_call.1} parent=5 // pred_check
        _
      $region42: #{tpu_custom_call.1} parent=5 // pred_check_branch
        %289 = sbr.rel (%p286) target = $region44
      $region43: #{tpu_custom_call.1} parent=5 // pred_region
        %s290 = ssub.s32 %s21, 1
        %s291 = sand.u32 %s34, 1
        %s292 = scalar_lea.sflag [#allocation3], %s291
        %s293 = sand.u32 %s34, 1
        %s294 = smul.addr %s293, 8
        %s295 = scalar_lea.vmem [#allocation2], %s294
        // Predicated region
        $region45: #{tpu_custom_call.1} parent=43 // pred_check
          %p296 = pneg %p47
        $region46: #{tpu_custom_call.1} parent=43 // pred_check_branch
          %298 = sbr.rel (%p296) target = $region48
        $region47: #{tpu_custom_call.1} parent=43 // pred_region
          %300 = dma.done %s292, 128
        $region48: #{tpu_custom_call.1} parent=43 // pred_fallthru
          _
        // Predicated region
        $region49: #{tpu_custom_call.1} parent=43 // pred_check
          %p301 = pneg %p68
        $region50: #{tpu_custom_call.1} parent=43 // pred_check_branch
          %303 = sbr.rel (%p301) target = $region52
        $region51: #{tpu_custom_call.1} parent=43 // pred_region
          %305 = dma.done [#allocation6], 384
        $region52: #{tpu_custom_call.1} parent=43 // pred_fallthru
          _
        // Predicated region
        $region53: #{tpu_custom_call.1} parent=43 // pred_check
          %p306 = pneg %p89
        $region54: #{tpu_custom_call.1} parent=43 // pred_check_branch
          %308 = sbr.rel (%p306) target = $region56
        $region55: #{tpu_custom_call.1} parent=43 // pred_region
          %310 = dma.done [#allocation6], 3072
        $region56: #{tpu_custom_call.1} parent=43 // pred_fallthru
          _
        // Predicated region
        $region57: #{tpu_custom_call.1} parent=43 // pred_check
          %p311 = pneg %p110
        $region58: #{tpu_custom_call.1} parent=43 // pred_check_branch
          %313 = sbr.rel (%p311) target = $region60
        $region59: #{tpu_custom_call.1} parent=43 // pred_region
          %315 = dma.done [#allocation9], 1024
        $region60: #{tpu_custom_call.1} parent=43 // pred_fallthru
          _
        // Predicated region
        $region61: #{tpu_custom_call.1} parent=43 // pred_check
          %p316 = pneg %p131
        $region62: #{tpu_custom_call.1} parent=43 // pred_check_branch
          %318 = sbr.rel (%p316) target = $region64
        $region63: #{tpu_custom_call.1} parent=43 // pred_region
          %320 = dma.done [#allocation9], 2048
        $region64: #{tpu_custom_call.1} parent=43 // pred_fallthru
          _
        // Predicated region
        $region65: #{tpu_custom_call.1} parent=43 // pred_check
          %p321 = pneg %p152
        $region66: #{tpu_custom_call.1} parent=43 // pred_check_branch
          %323 = sbr.rel (%p321) target = $region68
        $region67: #{tpu_custom_call.1} parent=43 // pred_region
          %325 = dma.done [#allocation12], 2048
        $region68: #{tpu_custom_call.1} parent=43 // pred_fallthru
          _
        %s326 = sand.u32 %s34, 1
        %s327 = scalar_lea.sflag [#allocation3], %s326
        %s328 = sand.u32 %s34, 1
        %s329 = smul.addr %s328, 8
        %s330 = scalar_lea.vmem [#allocation2], %s329
        %p331 = pneg %p47
        %p332 = pneg %p44
        %p333 = pneg %p68
        %p334 = pneg %p65
        %p335 = pneg %p89
        %p336 = pneg %p86
        %p337 = pneg %p110
        %p338 = pneg %p107
        %p339 = pneg %p131
        %p340 = pneg %p128
        %p341 = pneg %p152
        %p342 = pneg %p149
        %p343 = pneg %p178
        %p344 = pneg %p175
        %s345 = sand.u32 %s165, 1
        %s346 = scalar_lea.sflag [#allocation4], %s345
        %s347 = sand.u32 %s165, 1
        %s348 = smul.addr %s347, 8
        %s349 = scalar_lea.vmem [#allocation13], %s348
        %v351 = vld [vmem:[%s295] sm:$0xff]
        %v352 = vld [vmem:[#allocation5] sm:$0xff]
        %v353 = vld [vmem:[#allocation5 + $0x8] sm:$0xff]
        %v354 = vld [vmem:[#allocation5 + $0x10] sm:$0xff]
        %355 = vadd.xlane.f32.xlu0 %v351
        %v356 = vpop.xlane.xlu0 %355
        %v357 = vrcp.pop 128.0
        %v358 = vmul.f32 128.0, %v357
        %v359 = vsub.f32 1.0, %v358
        %v360 = vmul.f32 %v357, %v359
        %v361 = vadd.f32 %v357, %v360
        %vm362 = vweird.f32 %v357
        %v363 = vsel %vm362, %v357, %v361
        %v364 = vmul.f32 %v356, %v363
        %v365 = vmul.f32 %v351, %v351
        %366 = vadd.xlane.f32.xlu0 %v365
        %v367 = vpop.xlane.xlu0 %366
        %v368 = vmul.f32 %v367, %v363
        %v369 = vmul.f32 %v364, %v364
        %v370 = vsub.f32 %v368, %v369
        %v371 = vmax.f32 %v370, 0.0
        %v372 = vsub.f32 %v351, %v364
        %v373 = vadd.f32 %v371, 1e-05
        %v374 = vrsqrt.pop %v373
        %v375 = vmul.f32 %v374, %v373
        %v376 = vmul.f32 %v375, %v374
        %v377 = vmul.f32 0.5, %v376
        %v378 = vsub.f32 1.5, %v377
        %v379 = vmul.f32 %v374, %v378
        %vm380 = vweird.f32 %v373
        %vm381 = vweird.f32 %v374
        %vm382 = vmor %vm380, %vm381
        %v383 = vsel %vm382, %v374, %v379
        %v384 = vmul.f32 %v372, %v383
        %v385 = vperm.slane %v352, 1
        %v386 = vmul.f32 %v384, %v385
        %v387 = vperm.slane %v353, 1
        %v388 = vadd.f32 %v386, %v387
        %v389 = vpack.c.bf16 %v388, %v388
        %v390 = vld [vmem:[#allocation7] sm:$0xff]
        %v391 = vld [vmem:[#allocation7 + $0x8] sm:$0xf]
        %v392 = vld [vmem:[#allocation7 + $0xc] sm:$0xff]
        %v393 = vld [vmem:[#allocation7 + $0x14] sm:$0xf]
        %v394 = vld [vmem:[#allocation7 + $0x18] sm:$0xff]
        %v395 = vld [vmem:[#allocation7 + $0x20] sm:$0xf]
        %v396 = vld [vmem:[#allocation7 + $0x24] sm:$0xff]
        %v397 = vld [vmem:[#allocation7 + $0x2c] sm:$0xf]
        %v398 = vld [vmem:[#allocation7 + $0x30] sm:$0xff]
        %v399 = vld [vmem:[#allocation7 + $0x38] sm:$0xf]
        %v400 = vld [vmem:[#allocation7 + $0x3c] sm:$0xff]
        %v401 = vld [vmem:[#allocation7 + $0x44] sm:$0xf]
        %v402 = vld [vmem:[#allocation7 + $0x48] sm:$0xff]
        %v403 = vld [vmem:[#allocation7 + $0x50] sm:$0xf]
        %v404 = vld [vmem:[#allocation7 + $0x54] sm:$0xff]
        %v405 = vld [vmem:[#allocation7 + $0x5c] sm:$0xf]
        %v406 = vld [vmem:[#allocation7 + $0x60] sm:$0xff]
        %v407 = vld [vmem:[#allocation7 + $0x68] sm:$0xf]
        %v408 = vld [vmem:[#allocation7 + $0x6c] sm:$0xff]
        %v409 = vld [vmem:[#allocation7 + $0x74] sm:$0xf]
        %v410 = vld [vmem:[#allocation7 + $0x78] sm:$0xff]
        %v411 = vld [vmem:[#allocation7 + $0x80] sm:$0xf]
        %v412 = vld [vmem:[#allocation7 + $0x84] sm:$0xff]
        %v413 = vld [vmem:[#allocation7 + $0x8c] sm:$0xf]
        %v414 = vld [vmem:[#allocation7 + $0x90] sm:$0xff]
        %v415 = vld [vmem:[#allocation7 + $0x98] sm:$0xf]
        %v416 = vld [vmem:[#allocation7 + $0x9c] sm:$0xff]
        %v417 = vld [vmem:[#allocation7 + $0xa4] sm:$0xf]
        %v418 = vld [vmem:[#allocation7 + $0xa8] sm:$0xff]
        %v419 = vld [vmem:[#allocation7 + $0xb0] sm:$0xf]
        %v420 = vld [vmem:[#allocation7 + $0xb4] sm:$0xff]
        %v421 = vld [vmem:[#allocation7 + $0xbc] sm:$0xf]
        %v422 = vperm.slane %v352, 0
        %v423 = vperm.slane %v353, 0
        %v424 = vperm.slane %v354, 0
        %v457 = vunpack.c.l.b16 %v390
        %v458 = vunpack.c.h.b16 %v390
        %v459 = vunpack.c.l.b16 %v391
        %v460 = vunpack.c.l.b16 %v392
        %v461 = vunpack.c.h.b16 %v392
        %v462 = vunpack.c.l.b16 %v393
        %v463 = vunpack.c.l.b16 %v394
        %v464 = vunpack.c.h.b16 %v394
        %v465 = vunpack.c.l.b16 %v395
        %v466 = vunpack.c.l.b16 %v396
        %v467 = vunpack.c.h.b16 %v396
        %v468 = vunpack.c.l.b16 %v397
        %v469 = vunpack.c.l.b16 %v398
        %v470 = vunpack.c.h.b16 %v398
        %v471 = vunpack.c.l.b16 %v399
        %v472 = vunpack.c.l.b16 %v400
        %v473 = vunpack.c.h.b16 %v400
        %v474 = vunpack.c.l.b16 %v401
        %v475 = vunpack.c.l.b16 %v402
        %v476 = vunpack.c.h.b16 %v402
        %v477 = vunpack.c.l.b16 %v403
        %v478 = vunpack.c.l.b16 %v404
        %v479 = vunpack.c.h.b16 %v404
        %v480 = vunpack.c.l.b16 %v405
        %v481 = vunpack.c.l.b16 %v406
        %v482 = vunpack.c.h.b16 %v406
        %v483 = vunpack.c.l.b16 %v407
        %v484 = vunpack.c.l.b16 %v408
        %v485 = vunpack.c.h.b16 %v408
        %v486 = vunpack.c.l.b16 %v409
        %v487 = vunpack.c.l.b16 %v410
        %v488 = vunpack.c.h.b16 %v410
        %v489 = vunpack.c.l.b16 %v411
        %v490 = vunpack.c.l.b16 %v412
        %v491 = vunpack.c.h.b16 %v412
        %v492 = vunpack.c.l.b16 %v413
        %v493 = vunpack.c.l.b16 %v414
        %v494 = vunpack.c.h.b16 %v414
        %v495 = vunpack.c.l.b16 %v415
        %v496 = vunpack.c.l.b16 %v416
        %v497 = vunpack.c.h.b16 %v416
        %v498 = vunpack.c.l.b16 %v417
        %v499 = vunpack.c.l.b16 %v418
        %v500 = vunpack.c.h.b16 %v418
        %v501 = vunpack.c.l.b16 %v419
        %v502 = vunpack.c.l.b16 %v420
        %v503 = vunpack.c.h.b16 %v420
        %v504 = vunpack.c.l.b16 %v421
        %v505 = vpack.c.b16 %v460, %v457
        %v506 = vpack.c.b16 %v461, %v458
        %v507 = vpack.c.b16 %v462, %v459
        %v508 = vpack.c.b16 %v466, %v463
        %v509 = vpack.c.b16 %v467, %v464
        %v510 = vpack.c.b16 %v468, %v465
        %v511 = vpack.c.b16 %v472, %v469
        %v512 = vpack.c.b16 %v473, %v470
        %v513 = vpack.c.b16 %v474, %v471
        %v514 = vpack.c.b16 %v478, %v475
        %v515 = vpack.c.b16 %v479, %v476
        %v516 = vpack.c.b16 %v480, %v477
        %v517 = vpack.c.b16 %v484, %v481
        %v518 = vpack.c.b16 %v485, %v482
        %v519 = vpack.c.b16 %v486, %v483
        %v520 = vpack.c.b16 %v490, %v487
        %v521 = vpack.c.b16 %v491, %v488
        %v522 = vpack.c.b16 %v492, %v489
        %v523 = vpack.c.b16 %v496, %v493
        %v524 = vpack.c.b16 %v497, %v494
        %v525 = vpack.c.b16 %v498, %v495
        %v526 = vpack.c.b16 %v502, %v499
        %v527 = vpack.c.b16 %v503, %v500
        %v528 = vpack.c.b16 %v504, %v501
        %553 = vmatpush.bf16.msra.mxu0 %v526
        %554 = vmatpush.bf16.msra.mxu0 %v523
        %555 = vmatpush.bf16.msra.mxu0 %v520
        %556 = vmatpush.bf16.msra.mxu0 %v517
        %557 = vmatpush.bf16.msra.mxu0 %v514
        %558 = vmatpush.bf16.msra.mxu0 %v511
        %559 = vmatpush.bf16.msra.mxu0 %v508
        %560 = vmatpush.bf16.msra.mxu0 %v505
        %561 = vmatmul.bf16.gmra.mxu0 %v389
        %v562 = vpop.f32.mrf.mxu0
        %v563 = vadd.f32 %v422, %v562
        %v564 = vpop.f32.mrf.mxu0
        %565 = vdwg.mxu0
        %566 = vmatpush.bf16.msra.mxu0 %v527
        %567 = vmatpush.bf16.msra.mxu0 %v524
        %568 = vmatpush.bf16.msra.mxu0 %v521
        %569 = vmatpush.bf16.msra.mxu0 %v518
        %570 = vmatpush.bf16.msra.mxu0 %v515
        %571 = vmatpush.bf16.msra.mxu0 %v512
        %572 = vmatpush.bf16.msra.mxu0 %v509
        %573 = vmatpush.bf16.msra.mxu0 %v506
        %574 = vmatmul.bf16.gmra.mxu0 %v389
        %v575 = vpop.f32.mrf.mxu0
        %v576 = vadd.f32 %v423, %v575
        %v577 = vpop.f32.mrf.mxu0
        %578 = vdwg.mxu0
        %579 = vmatpush.bf16.msra.mxu0 %v528
        %580 = vmatpush.bf16.msra.mxu0 %v525
        %581 = vmatpush.bf16.msra.mxu0 %v522
        %582 = vmatpush.bf16.msra.mxu0 %v519
        %583 = vmatpush.bf16.msra.mxu0 %v516
        %584 = vmatpush.bf16.msra.mxu0 %v513
        %585 = vmatpush.bf16.msra.mxu0 %v510
        %586 = vmatpush.bf16.msra.mxu0 %v507
        %587 = vmatmul.bf16.gmra.mxu0 %v389
        %v588 = vpop.f32.mrf.mxu0
        %v589 = vadd.f32 %v424, %v588
        %v590 = vpop.f32.mrf.mxu0
        %591 = vdwg.mxu0
        %v592 = vpack.c.bf16 %v576, %v563
        %v593 = vpack.c.bf16 %v589, %v589
        %v594 = vld [vmem:[#allocation8] sm:$0xf]
        %v595 = vld [vmem:[#allocation8 + $0x4] sm:$0xf]
        %v596 = vld [vmem:[#allocation8 + $0x8] sm:$0xf]
        %v597 = vld [vmem:[#allocation8 + $0xc] sm:$0xf]
        %v598 = vld [vmem:[#allocation8 + $0x10] sm:$0xf]
        %v599 = vld [vmem:[#allocation8 + $0x14] sm:$0xf]
        %v600 = vld [vmem:[#allocation8 + $0x18] sm:$0xf]
        %v601 = vld [vmem:[#allocation8 + $0x1c] sm:$0xf]
        %v602 = vld [vmem:[#allocation8 + $0x20] sm:$0xf]
        %v603 = vld [vmem:[#allocation8 + $0x24] sm:$0xf]
        %v604 = vld [vmem:[#allocation8 + $0x28] sm:$0xf]
        %v605 = vld [vmem:[#allocation8 + $0x2c] sm:$0xf]
        %v606 = vld [vmem:[#allocation8 + $0x30] sm:$0xf]
        %v607 = vld [vmem:[#allocation8 + $0x34] sm:$0xf]
        %v608 = vld [vmem:[#allocation8 + $0x38] sm:$0xf]
        %v609 = vld [vmem:[#allocation8 + $0x3c] sm:$0xf]
        %v611 = vrot.slane %v592, 4
        %vm612 = vcmask 261120
        %v614 = vsel %vm612, %v592, 0
        %v617 = vsel %vm612, %v611, 0
        %619 = vmatpush.bf16.xpose.msra.mxu0 0
        %620 = vmatpush.bf16.xpose.msra.mxu0 0
        %621 = vmatpush.bf16.xpose.msra.mxu0 0
        %622 = vmatpush.bf16.xpose.msra.mxu0 0
        %623 = vmatpush.bf16.xpose.msra.mxu0 0
        %624 = vmatpush.bf16.xpose.msra.mxu0 0
        %625 = vmatpush.bf16.xpose.msra.mxu0 0
        %626 = vmatpush.bf16.xpose.msra.mxu0 %v617
        %627 = vmatmul.bf16.gmra.mxu0 %v614
        %v628 = vpop.f32.mrf.mxu0
        %v629 = vadd.f32 0.0, %v628
        %v630 = vpop.f32.mrf.mxu0
        %631 = vdwg.mxu0
        %vm632 = vcmask 64512
        %v633 = vsel %vm632, %v629, -inf
        %634 = vmax.xlane.f32.xlu0 %v633
        %v635 = vpop.xlane.xlu0 %634
        %v636 = vsub.f32 %v629, %v635
        %v637 = vmul.f32 %v636, 1.442695
        %v638 = vpow.pop %v637
        %v639 = vsel %vm632, %v638, 0.0
        %640 = vadd.xlane.f32.xlu0 %v639
        %v641 = vpop.xlane.xlu0 %640
        %v642 = vrcp.pop %v641
        %v643 = vmul.f32 %v638, %v642
        %v644 = vpack.c.bf16 %v643, %v643
        %v646 = vsel %vm632, %v644, 0
        %vm648 = vcmask 1043456
        %v650 = vsel %vm648, %v593, 0
        %652 = vmatpush.bf16.msra.mxu0 0
        %653 = vmatpush.bf16.msra.mxu0 0
        %654 = vmatpush.bf16.msra.mxu0 0
        %655 = vmatpush.bf16.msra.mxu0 0
        %656 = vmatpush.bf16.msra.mxu0 0
        %657 = vmatpush.bf16.msra.mxu0 0
        %658 = vmatpush.bf16.msra.mxu0 0
        %659 = vmatpush.bf16.msra.mxu0 %v650
        %660 = vmatmul.bf16.gmra.mxu0 %v646
        %v661 = vpop.f32.mrf.mxu0
        %v662 = vadd.f32 0.0, %v661
        %v663 = vpop.f32.mrf.mxu0
        %664 = vdwg.mxu0
        %v665 = vpack.c.bf16 %v662, %v662
        %666 = vrot.lane.b32.xlu0 %v592, 96
        %v667 = vpop.permute.xlu0 %666
        %v668 = vrot.slane %v667, 4
        %v669 = vunpack.c.l.b16 %v592
        %v670 = vpack.c.b16 %v669, %v669
        %671 = vrot.lane.b32.xlu0 %v670, 96
        %v672 = vpop.permute.xlu0 %671
        %v674 = vsel %vm612, %v672, 0
        %v677 = vsel %vm612, %v668, 0
        %679 = vmatpush.bf16.xpose.msra.mxu0 0
        %680 = vmatpush.bf16.xpose.msra.mxu0 0
        %681 = vmatpush.bf16.xpose.msra.mxu0 0
        %682 = vmatpush.bf16.xpose.msra.mxu0 0
        %683 = vmatpush.bf16.xpose.msra.mxu0 0
        %684 = vmatpush.bf16.xpose.msra.mxu0 0
        %685 = vmatpush.bf16.xpose.msra.mxu0 0
        %686 = vmatpush.bf16.xpose.msra.mxu0 %v677
        %687 = vmatmul.bf16.gmra.mxu0 %v674
        %v688 = vpop.f32.mrf.mxu0
        %v689 = vadd.f32 0.0, %v688
        %v690 = vpop.f32.mrf.mxu0
        %691 = vdwg.mxu0
        %v692 = vsel %vm632, %v689, -inf
        %693 = vmax.xlane.f32.xlu0 %v692
        %v694 = vpop.xlane.xlu0 %693
        %v695 = vsub.f32 %v689, %v694
        %v696 = vmul.f32 %v695, 1.442695
        %v697 = vpow.pop %v696
        %v698 = vsel %vm632, %v697, 0.0
        %699 = vadd.xlane.f32.xlu0 %v698
        %v700 = vpop.xlane.xlu0 %699
        %v701 = vrcp.pop %v700
        %v702 = vmul.f32 %v697, %v701
        %v703 = vpack.c.bf16 %v702, %v702
        %v705 = vunpack.c.l.b16 %v593
        %v706 = vpack.c.b16 %v705, %v705
        %707 = vrot.lane.b32.xlu0 %v706, 96
        %v708 = vpop.permute.xlu0 %707
        %v710 = vsel %vm632, %v703, 0
        %v713 = vsel %vm648, %v708, 0
        %715 = vmatpush.bf16.msra.mxu0 0
        %716 = vmatpush.bf16.msra.mxu0 0
        %717 = vmatpush.bf16.msra.mxu0 0
        %718 = vmatpush.bf16.msra.mxu0 0
        %719 = vmatpush.bf16.msra.mxu0 0
        %720 = vmatpush.bf16.msra.mxu0 0
        %721 = vmatpush.bf16.msra.mxu0 0
        %722 = vmatpush.bf16.msra.mxu0 %v713
        %723 = vmatmul.bf16.gmra.mxu0 %v710
        %v724 = vpop.f32.mrf.mxu0
        %v725 = vadd.f32 0.0, %v724
        %v726 = vpop.f32.mrf.mxu0
        %727 = vdwg.mxu0
        %v728 = vpack.c.bf16 %v725, %v725
        %v733 = vunpack.c.l.b16 %v598
        %v734 = vunpack.c.l.b16 %v599
        %v735 = vunpack.c.l.b16 %v600
        %v736 = vunpack.c.l.b16 %v601
        %v737 = vpack.c.b16 %v734, %v733
        %v738 = vpack.c.b16 %v736, %v735
        %v742 = vsel %vm612, %v728, 0
        %744 = vmatpush.bf16.msra.mxu0 0
        %745 = vmatpush.bf16.msra.mxu0 0
        %746 = vmatpush.bf16.msra.mxu0 0
        %747 = vmatpush.bf16.msra.mxu0 0
        %748 = vmatpush.bf16.msra.mxu0 0
        %749 = vmatpush.bf16.msra.mxu0 0
        %750 = vmatpush.bf16.msra.mxu0 %v738
        %751 = vmatpush.bf16.msra.mxu0 %v737
        %752 = vmatmul.bf16.gmra.mxu0 %v742
        %v753 = vpop.f32.mrf.mxu0
        %v754 = vadd.f32 0.0, %v753
        %v755 = vpop.f32.mrf.mxu0
        %756 = vdwg.mxu0
        %v761 = vunpack.c.l.b16 %v594
        %v762 = vunpack.c.l.b16 %v595
        %v763 = vunpack.c.l.b16 %v596
        %v764 = vunpack.c.l.b16 %v597
        %v765 = vpack.c.b16 %v762, %v761
        %v766 = vpack.c.b16 %v764, %v763
        %v770 = vsel %vm612, %v665, 0
        %772 = vmatpush.bf16.msra.mxu0 0
        %773 = vmatpush.bf16.msra.mxu0 0
        %774 = vmatpush.bf16.msra.mxu0 0
        %775 = vmatpush.bf16.msra.mxu0 0
        %776 = vmatpush.bf16.msra.mxu0 0
        %777 = vmatpush.bf16.msra.mxu0 0
        %778 = vmatpush.bf16.msra.mxu0 %v766
        %779 = vmatpush.bf16.msra.mxu0 %v765
        %780 = vmatmul.bf16.gmra.mxu0 %v770
        %v781 = vpop.f32.mrf.mxu0
        %v782 = vadd.f32 %v754, %v781
        %v783 = vpop.f32.mrf.mxu0
        %784 = vdwg.mxu0
        %785 = vrot.lane.b32.xlu0 %v592, 64
        %v786 = vpop.permute.xlu0 %785
        %v787 = vrot.slane %v786, 4
        %788 = vrot.lane.b32.xlu0 %v670, 64
        %v789 = vpop.permute.xlu0 %788
        %v791 = vsel %vm612, %v789, 0
        %v794 = vsel %vm612, %v787, 0
        %796 = vmatpush.bf16.xpose.msra.mxu0 0
        %797 = vmatpush.bf16.xpose.msra.mxu0 0
        %798 = vmatpush.bf16.xpose.msra.mxu0 0
        %799 = vmatpush.bf16.xpose.msra.mxu0 0
        %800 = vmatpush.bf16.xpose.msra.mxu0 0
        %801 = vmatpush.bf16.xpose.msra.mxu0 0
        %802 = vmatpush.bf16.xpose.msra.mxu0 0
        %803 = vmatpush.bf16.xpose.msra.mxu0 %v794
        %804 = vmatmul.bf16.gmra.mxu0 %v791
        %v805 = vpop.f32.mrf.mxu0
        %v806 = vadd.f32 0.0, %v805
        %v807 = vpop.f32.mrf.mxu0
        %808 = vdwg.mxu0
        %v809 = vsel %vm632, %v806, -inf
        %810 = vmax.xlane.f32.xlu0 %v809
        %v811 = vpop.xlane.xlu0 %810
        %v812 = vsub.f32 %v806, %v811
        %v813 = vmul.f32 %v812, 1.442695
        %v814 = vpow.pop %v813
        %v815 = vsel %vm632, %v814, 0.0
        %816 = vadd.xlane.f32.xlu0 %v815
        %v817 = vpop.xlane.xlu0 %816
        %v818 = vrcp.pop %v817
        %v819 = vmul.f32 %v814, %v818
        %v820 = vpack.c.bf16 %v819, %v819
        %821 = vrot.lane.b32.xlu0 %v706, 64
        %v822 = vpop.permute.xlu0 %821
        %v824 = vsel %vm632, %v820, 0
        %v827 = vsel %vm648, %v822, 0
        %829 = vmatpush.bf16.msra.mxu0 0
        %830 = vmatpush.bf16.msra.mxu0 0
        %831 = vmatpush.bf16.msra.mxu0 0
        %832 = vmatpush.bf16.msra.mxu0 0
        %833 = vmatpush.bf16.msra.mxu0 0
        %834 = vmatpush.bf16.msra.mxu0 0
        %835 = vmatpush.bf16.msra.mxu0 0
        %836 = vmatpush.bf16.msra.mxu0 %v827
        %837 = vmatmul.bf16.gmra.mxu0 %v824
        %v838 = vpop.f32.mrf.mxu0
        %v839 = vadd.f32 0.0, %v838
        %v840 = vpop.f32.mrf.mxu0
        %841 = vdwg.mxu0
        %v842 = vpack.c.bf16 %v839, %v839
        %v847 = vunpack.c.l.b16 %v602
        %v848 = vunpack.c.l.b16 %v603
        %v849 = vunpack.c.l.b16 %v604
        %v850 = vunpack.c.l.b16 %v605
        %v851 = vpack.c.b16 %v848, %v847
        %v852 = vpack.c.b16 %v850, %v849
        %v856 = vsel %vm612, %v842, 0
        %858 = vmatpush.bf16.msra.mxu0 0
        %859 = vmatpush.bf16.msra.mxu0 0
        %860 = vmatpush.bf16.msra.mxu0 0
        %861 = vmatpush.bf16.msra.mxu0 0
        %862 = vmatpush.bf16.msra.mxu0 0
        %863 = vmatpush.bf16.msra.mxu0 0
        %864 = vmatpush.bf16.msra.mxu0 %v852
        %865 = vmatpush.bf16.msra.mxu0 %v851
        %866 = vmatmul.bf16.gmra.mxu0 %v856
        %v867 = vpop.f32.mrf.mxu0
        %v868 = vadd.f32 0.0, %v867
        %v869 = vpop.f32.mrf.mxu0
        %870 = vdwg.mxu0
        %v871 = vadd.f32 %v782, %v868
        %872 = vrot.lane.b32.xlu0 %v592, 32
        %v873 = vpop.permute.xlu0 %872
        %v874 = vrot.slane %v873, 4
        %875 = vrot.lane.b32.xlu0 %v670, 32
        %v876 = vpop.permute.xlu0 %875
        %v878 = vsel %vm612, %v876, 0
        %v881 = vsel %vm612, %v874, 0
        %883 = vmatpush.bf16.xpose.msra.mxu0 0
        %884 = vmatpush.bf16.xpose.msra.mxu0 0
        %885 = vmatpush.bf16.xpose.msra.mxu0 0
        %886 = vmatpush.bf16.xpose.msra.mxu0 0
        %887 = vmatpush.bf16.xpose.msra.mxu0 0
        %888 = vmatpush.bf16.xpose.msra.mxu0 0
        %889 = vmatpush.bf16.xpose.msra.mxu0 0
        %890 = vmatpush.bf16.xpose.msra.mxu0 %v881
        %891 = vmatmul.bf16.gmra.mxu0 %v878
        %v892 = vpop.f32.mrf.mxu0
        %v893 = vadd.f32 0.0, %v892
        %v894 = vpop.f32.mrf.mxu0
        %895 = vdwg.mxu0
        %v896 = vsel %vm632, %v893, -inf
        %897 = vmax.xlane.f32.xlu0 %v896
        %v898 = vpop.xlane.xlu0 %897
        %v899 = vsub.f32 %v893, %v898
        %v900 = vmul.f32 %v899, 1.442695
        %v901 = vpow.pop %v900
        %v902 = vsel %vm632, %v901, 0.0
        %903 = vadd.xlane.f32.xlu0 %v902
        %v904 = vpop.xlane.xlu0 %903
        %v905 = vrcp.pop %v904
        %v906 = vmul.f32 %v901, %v905
        %v907 = vpack.c.bf16 %v906, %v906
        %908 = vrot.lane.b32.xlu0 %v706, 32
        %v909 = vpop.permute.xlu0 %908
        %v911 = vsel %vm632, %v907, 0
        %v914 = vsel %vm648, %v909, 0
        %916 = vmatpush.bf16.msra.mxu0 0
        %917 = vmatpush.bf16.msra.mxu0 0
        %918 = vmatpush.bf16.msra.mxu0 0
        %919 = vmatpush.bf16.msra.mxu0 0
        %920 = vmatpush.bf16.msra.mxu0 0
        %921 = vmatpush.bf16.msra.mxu0 0
        %922 = vmatpush.bf16.msra.mxu0 0
        %923 = vmatpush.bf16.msra.mxu0 %v914
        %924 = vmatmul.bf16.gmra.mxu0 %v911
        %v925 = vpop.f32.mrf.mxu0
        %v926 = vadd.f32 0.0, %v925
        %v927 = vpop.f32.mrf.mxu0
        %928 = vdwg.mxu0
        %v929 = vpack.c.bf16 %v926, %v926
        %v934 = vunpack.c.l.b16 %v606
        %v935 = vunpack.c.l.b16 %v607
        %v936 = vunpack.c.l.b16 %v608
        %v937 = vunpack.c.l.b16 %v609
        %v938 = vpack.c.b16 %v935, %v934
        %v939 = vpack.c.b16 %v937, %v936
        %v943 = vsel %vm612, %v929, 0
        %945 = vmatpush.bf16.msra.mxu0 0
        %946 = vmatpush.bf16.msra.mxu0 0
        %947 = vmatpush.bf16.msra.mxu0 0
        %948 = vmatpush.bf16.msra.mxu0 0
        %949 = vmatpush.bf16.msra.mxu0 0
        %950 = vmatpush.bf16.msra.mxu0 0
        %951 = vmatpush.bf16.msra.mxu0 %v939
        %952 = vmatpush.bf16.msra.mxu0 %v938
        %953 = vmatmul.bf16.gmra.mxu0 %v943
        %v954 = vpop.f32.mrf.mxu0
        %v955 = vadd.f32 0.0, %v954
        %v956 = vpop.f32.mrf.mxu0
        %957 = vdwg.mxu0
        %v958 = vadd.f32 %v871, %v955
        %v959 = vadd.f32 %v351, %v958
        %v960 = vperm.slane %v354, 1
        %v961 = vadd.f32 %v959, %v960
        %962 = vadd.xlane.f32.xlu0 %v961
        %v963 = vpop.xlane.xlu0 %962
        %v964 = vmul.f32 %v963, %v363
        %v965 = vmul.f32 %v961, %v961
        %966 = vadd.xlane.f32.xlu0 %v965
        %v967 = vpop.xlane.xlu0 %966
        %v968 = vmul.f32 %v967, %v363
        %v969 = vmul.f32 %v964, %v964
        %v970 = vsub.f32 %v968, %v969
        %v971 = vmax.f32 %v970, 0.0
        %v972 = vsub.f32 %v961, %v964
        %v973 = vadd.f32 %v971, 1e-05
        %v974 = vrsqrt.pop %v973
        %v975 = vmul.f32 %v974, %v973
        %v976 = vmul.f32 %v975, %v974
        %v977 = vmul.f32 0.5, %v976
        %v978 = vsub.f32 1.5, %v977
        %v979 = vmul.f32 %v974, %v978
        %vm980 = vweird.f32 %v973
        %vm981 = vweird.f32 %v974
        %vm982 = vmor %vm980, %vm981
        %v983 = vsel %vm982, %v974, %v979
        %v984 = vmul.f32 %v972, %v983
        %v985 = vperm.slane %v352, 2
        %v986 = vmul.f32 %v984, %v985
        %v987 = vperm.slane %v353, 2
        %v988 = vadd.f32 %v986, %v987
        %v989 = vpack.c.bf16 %v988, %v988
        %v990 = vld [vmem:[#allocation10] sm:$0xff]
        %v991 = vld [vmem:[#allocation10 + $0x8] sm:$0xff]
        %v992 = vld [vmem:[#allocation10 + $0x10] sm:$0xff]
        %v993 = vld [vmem:[#allocation10 + $0x18] sm:$0xff]
        %v994 = vld [vmem:[#allocation10 + $0x20] sm:$0xff]
        %v995 = vld [vmem:[#allocation10 + $0x28] sm:$0xff]
        %v996 = vld [vmem:[#allocation10 + $0x30] sm:$0xff]
        %v997 = vld [vmem:[#allocation10 + $0x38] sm:$0xff]
        %v998 = vld [vmem:[#allocation10 + $0x40] sm:$0xff]
        %v999 = vld [vmem:[#allocation10 + $0x48] sm:$0xff]
        %v1000 = vld [vmem:[#allocation10 + $0x50] sm:$0xff]
        %v1001 = vld [vmem:[#allocation10 + $0x58] sm:$0xff]
        %v1002 = vld [vmem:[#allocation10 + $0x60] sm:$0xff]
        %v1003 = vld [vmem:[#allocation10 + $0x68] sm:$0xff]
        %v1004 = vld [vmem:[#allocation10 + $0x70] sm:$0xff]
        %v1005 = vld [vmem:[#allocation10 + $0x78] sm:$0xff]
        %v1006 = vperm.slane %v352, 3
        %v1007 = vperm.slane %v353, 3
        %v1024 = vunpack.c.l.b16 %v990
        %v1025 = vunpack.c.h.b16 %v990
        %v1026 = vunpack.c.l.b16 %v991
        %v1027 = vunpack.c.h.b16 %v991
        %v1028 = vunpack.c.l.b16 %v992
        %v1029 = vunpack.c.h.b16 %v992
        %v1030 = vunpack.c.l.b16 %v993
        %v1031 = vunpack.c.h.b16 %v993
        %v1032 = vunpack.c.l.b16 %v994
        %v1033 = vunpack.c.h.b16 %v994
        %v1034 = vunpack.c.l.b16 %v995
        %v1035 = vunpack.c.h.b16 %v995
        %v1036 = vunpack.c.l.b16 %v996
        %v1037 = vunpack.c.h.b16 %v996
        %v1038 = vunpack.c.l.b16 %v997
        %v1039 = vunpack.c.h.b16 %v997
        %v1040 = vunpack.c.l.b16 %v998
        %v1041 = vunpack.c.h.b16 %v998
        %v1042 = vunpack.c.l.b16 %v999
        %v1043 = vunpack.c.h.b16 %v999
        %v1044 = vunpack.c.l.b16 %v1000
        %v1045 = vunpack.c.h.b16 %v1000
        %v1046 = vunpack.c.l.b16 %v1001
        %v1047 = vunpack.c.h.b16 %v1001
        %v1048 = vunpack.c.l.b16 %v1002
        %v1049 = vunpack.c.h.b16 %v1002
        %v1050 = vunpack.c.l.b16 %v1003
        %v1051 = vunpack.c.h.b16 %v1003
        %v1052 = vunpack.c.l.b16 %v1004
        %v1053 = vunpack.c.h.b16 %v1004
        %v1054 = vunpack.c.l.b16 %v1005
        %v1055 = vunpack.c.h.b16 %v1005
        %v1056 = vpack.c.b16 %v1026, %v1024
        %v1057 = vpack.c.b16 %v1027, %v1025
        %v1058 = vpack.c.b16 %v1030, %v1028
        %v1059 = vpack.c.b16 %v1031, %v1029
        %v1060 = vpack.c.b16 %v1034, %v1032
        %v1061 = vpack.c.b16 %v1035, %v1033
        %v1062 = vpack.c.b16 %v1038, %v1036
        %v1063 = vpack.c.b16 %v1039, %v1037
        %v1064 = vpack.c.b16 %v1042, %v1040
        %v1065 = vpack.c.b16 %v1043, %v1041
        %v1066 = vpack.c.b16 %v1046, %v1044
        %v1067 = vpack.c.b16 %v1047, %v1045
        %v1068 = vpack.c.b16 %v1050, %v1048
        %v1069 = vpack.c.b16 %v1051, %v1049
        %v1070 = vpack.c.b16 %v1054, %v1052
        %v1071 = vpack.c.b16 %v1055, %v1053
        %1088 = vmatpush.bf16.msra.mxu0 %v1070
        %1089 = vmatpush.bf16.msra.mxu0 %v1068
        %1090 = vmatpush.bf16.msra.mxu0 %v1066
        %1091 = vmatpush.bf16.msra.mxu0 %v1064
        %1092 = vmatpush.bf16.msra.mxu0 %v1062
        %1093 = vmatpush.bf16.msra.mxu0 %v1060
        %1094 = vmatpush.bf16.msra.mxu0 %v1058
        %1095 = vmatpush.bf16.msra.mxu0 %v1056
        %1096 = vmatmul.bf16.gmra.mxu0 %v989
        %v1097 = vpop.f32.mrf.mxu0
        %v1098 = vadd.f32 %v1006, %v1097
        %v1099 = vpop.f32.mrf.mxu0
        %1100 = vdwg.mxu0
        %1101 = vmatpush.bf16.msra.mxu0 %v1071
        %1102 = vmatpush.bf16.msra.mxu0 %v1069
        %1103 = vmatpush.bf16.msra.mxu0 %v1067
        %1104 = vmatpush.bf16.msra.mxu0 %v1065
        %1105 = vmatpush.bf16.msra.mxu0 %v1063
        %1106 = vmatpush.bf16.msra.mxu0 %v1061
        %1107 = vmatpush.bf16.msra.mxu0 %v1059
        %1108 = vmatpush.bf16.msra.mxu0 %v1057
        %1109 = vmatmul.bf16.gmra.mxu0 %v989
        %v1110 = vpop.f32.mrf.mxu0
        %v1111 = vadd.f32 %v1007, %v1110
        %v1112 = vpop.f32.mrf.mxu0
        %1113 = vdwg.mxu0
        %v1114 = vadd.f32 %v1098, %v1111
        %1115 = vadd.xlane.f32.xlu0 %v1114
        %v1116 = vpop.xlane.xlu0 %1115
        %v1117 = vrcp.pop 256.0
        %v1118 = vmul.f32 256.0, %v1117
        %v1119 = vsub.f32 1.0, %v1118
        %v1120 = vmul.f32 %v1117, %v1119
        %v1121 = vadd.f32 %v1117, %v1120
        %vm1122 = vweird.f32 %v1117
        %v1123 = vsel %vm1122, %v1117, %v1121
        %v1124 = vmul.f32 %v1116, %v1123
        %v1125 = vmul.f32 %v1098, %v1098
        %v1126 = vmul.f32 %v1111, %v1111
        %v1127 = vadd.f32 %v1125, %v1126
        %1128 = vadd.xlane.f32.xlu0 %v1127
        %v1129 = vpop.xlane.xlu0 %1128
        %v1130 = vmul.f32 %v1129, %v1123
        %v1131 = vmul.f32 %v1124, %v1124
        %v1132 = vsub.f32 %v1130, %v1131
        %v1133 = vmax.f32 %v1132, 0.0
        %v1134 = vsub.f32 %v1098, %v1124
        %v1135 = vsub.f32 %v1111, %v1124
        %v1136 = vadd.f32 %v1133, 1e-05
        %v1137 = vrsqrt.pop %v1136
        %v1138 = vmul.f32 %v1137, %v1136
        %v1139 = vmul.f32 %v1138, %v1137
        %v1140 = vmul.f32 0.5, %v1139
        %v1141 = vsub.f32 1.5, %v1140
        %v1142 = vmul.f32 %v1137, %v1141
        %vm1143 = vweird.f32 %v1136
        %vm1144 = vweird.f32 %v1137
        %vm1145 = vmor %vm1143, %vm1144
        %v1146 = vsel %vm1145, %v1137, %v1142
        %v1147 = vmul.f32 %v1134, %v1146
        %v1148 = vmul.f32 %v1135, %v1146
        %v1149 = vperm.slane %v352, 4
        %v1150 = vperm.slane %v353, 4
        %v1151 = vmul.f32 %v1147, %v1149
        %v1152 = vmul.f32 %v1148, %v1150
        %v1153 = vperm.slane %v352, 5
        %v1154 = vperm.slane %v353, 5
        %v1155 = vadd.f32 %v1151, %v1153
        %v1156 = vadd.f32 %v1152, %v1154
        %vm1157 = vcmp.gt.f32.partialorder %v1155, 0.0
        %vm1158 = vcmp.gt.f32.partialorder %v1156, 0.0
        %v1159 = vmin.f32 %v1155, 0.0
        %v1160 = vmin.f32 %v1156, 0.0
        %v1161 = vmul.f32 %v1159, 1.442695
        %v1162 = vpow.pop %v1161
        %v1163 = vmul.f32 %v1160, 1.442695
        %v1164 = vpow.pop %v1163
        %v1165 = vsub.f32 %v1162, 1.0
        %v1166 = vsub.f32 %v1164, 1.0
        %v1167 = vsel %vm1157, %v1155, %v1165
        %v1168 = vsel %vm1158, %v1156, %v1166
        %v1169 = vpack.c.bf16 %v1167, %v1167
        %v1170 = vpack.c.bf16 %v1168, %v1168
        %v1171 = vld [vmem:[#allocation11] sm:$0xf]
        %v1172 = vld [vmem:[#allocation11 + $0x4] sm:$0xf]
        %v1173 = vld [vmem:[#allocation11 + $0x8] sm:$0xf]
        %v1174 = vld [vmem:[#allocation11 + $0xc] sm:$0xf]
        %v1175 = vld [vmem:[#allocation11 + $0x10] sm:$0xf]
        %v1176 = vld [vmem:[#allocation11 + $0x14] sm:$0xf]
        %v1177 = vld [vmem:[#allocation11 + $0x18] sm:$0xf]
        %v1178 = vld [vmem:[#allocation11 + $0x1c] sm:$0xf]
        %v1179 = vld [vmem:[#allocation11 + $0x20] sm:$0xf]
        %v1180 = vld [vmem:[#allocation11 + $0x24] sm:$0xf]
        %v1181 = vld [vmem:[#allocation11 + $0x28] sm:$0xf]
        %v1182 = vld [vmem:[#allocation11 + $0x2c] sm:$0xf]
        %v1183 = vld [vmem:[#allocation11 + $0x30] sm:$0xf]
        %v1184 = vld [vmem:[#allocation11 + $0x34] sm:$0xf]
        %v1185 = vld [vmem:[#allocation11 + $0x38] sm:$0xf]
        %v1186 = vld [vmem:[#allocation11 + $0x3c] sm:$0xf]
        %v1187 = vld [vmem:[#allocation11 + $0x40] sm:$0xf]
        %v1188 = vld [vmem:[#allocation11 + $0x44] sm:$0xf]
        %v1189 = vld [vmem:[#allocation11 + $0x48] sm:$0xf]
        %v1190 = vld [vmem:[#allocation11 + $0x4c] sm:$0xf]
        %v1191 = vld [vmem:[#allocation11 + $0x50] sm:$0xf]
        %v1192 = vld [vmem:[#allocation11 + $0x54] sm:$0xf]
        %v1193 = vld [vmem:[#allocation11 + $0x58] sm:$0xf]
        %v1194 = vld [vmem:[#allocation11 + $0x5c] sm:$0xf]
        %v1195 = vld [vmem:[#allocation11 + $0x60] sm:$0xf]
        %v1196 = vld [vmem:[#allocation11 + $0x64] sm:$0xf]
        %v1197 = vld [vmem:[#allocation11 + $0x68] sm:$0xf]
        %v1198 = vld [vmem:[#allocation11 + $0x6c] sm:$0xf]
        %v1199 = vld [vmem:[#allocation11 + $0x70] sm:$0xf]
        %v1200 = vld [vmem:[#allocation11 + $0x74] sm:$0xf]
        %v1201 = vld [vmem:[#allocation11 + $0x78] sm:$0xf]
        %v1202 = vld [vmem:[#allocation11 + $0x7c] sm:$0xf]
        %v1203 = vperm.slane %v354, 2
        %v1236 = vunpack.c.l.b16 %v1171
        %v1237 = vunpack.c.l.b16 %v1172
        %v1238 = vunpack.c.l.b16 %v1173
        %v1239 = vunpack.c.l.b16 %v1174
        %v1240 = vunpack.c.l.b16 %v1175
        %v1241 = vunpack.c.l.b16 %v1176
        %v1242 = vunpack.c.l.b16 %v1177
        %v1243 = vunpack.c.l.b16 %v1178
        %v1244 = vunpack.c.l.b16 %v1179
        %v1245 = vunpack.c.l.b16 %v1180
        %v1246 = vunpack.c.l.b16 %v1181
        %v1247 = vunpack.c.l.b16 %v1182
        %v1248 = vunpack.c.l.b16 %v1183
        %v1249 = vunpack.c.l.b16 %v1184
        %v1250 = vunpack.c.l.b16 %v1185
        %v1251 = vunpack.c.l.b16 %v1186
        %v1252 = vunpack.c.l.b16 %v1187
        %v1253 = vunpack.c.l.b16 %v1188
        %v1254 = vunpack.c.l.b16 %v1189
        %v1255 = vunpack.c.l.b16 %v1190
        %v1256 = vunpack.c.l.b16 %v1191
        %v1257 = vunpack.c.l.b16 %v1192
        %v1258 = vunpack.c.l.b16 %v1193
        %v1259 = vunpack.c.l.b16 %v1194
        %v1260 = vunpack.c.l.b16 %v1195
        %v1261 = vunpack.c.l.b16 %v1196
        %v1262 = vunpack.c.l.b16 %v1197
        %v1263 = vunpack.c.l.b16 %v1198
        %v1264 = vunpack.c.l.b16 %v1199
        %v1265 = vunpack.c.l.b16 %v1200
        %v1266 = vunpack.c.l.b16 %v1201
        %v1267 = vunpack.c.l.b16 %v1202
        %v1268 = vpack.c.b16 %v1237, %v1236
        %v1269 = vpack.c.b16 %v1239, %v1238
        %v1270 = vpack.c.b16 %v1241, %v1240
        %v1271 = vpack.c.b16 %v1243, %v1242
        %v1272 = vpack.c.b16 %v1245, %v1244
        %v1273 = vpack.c.b16 %v1247, %v1246
        %v1274 = vpack.c.b16 %v1249, %v1248
        %v1275 = vpack.c.b16 %v1251, %v1250
        %v1276 = vpack.c.b16 %v1253, %v1252
        %v1277 = vpack.c.b16 %v1255, %v1254
        %v1278 = vpack.c.b16 %v1257, %v1256
        %v1279 = vpack.c.b16 %v1259, %v1258
        %v1280 = vpack.c.b16 %v1261, %v1260
        %v1281 = vpack.c.b16 %v1263, %v1262
        %v1282 = vpack.c.b16 %v1265, %v1264
        %v1283 = vpack.c.b16 %v1267, %v1266
        %1300 = vmatpush.bf16.msra.mxu0 %v1275
        %1301 = vmatpush.bf16.msra.mxu0 %v1274
        %1302 = vmatpush.bf16.msra.mxu0 %v1273
        %1303 = vmatpush.bf16.msra.mxu0 %v1272
        %1304 = vmatpush.bf16.msra.mxu0 %v1271
        %1305 = vmatpush.bf16.msra.mxu0 %v1270
        %1306 = vmatpush.bf16.msra.mxu0 %v1269
        %1307 = vmatpush.bf16.msra.mxu0 %v1268
        %1308 = vmatmul.bf16.gmra.mxu0 %v1169
        %v1309 = vpop.f32.mrf.mxu0
        %v1310 = vadd.f32 %v1203, %v1309
        %v1311 = vpop.f32.mrf.mxu0
        %1312 = vdwg.mxu0
        %1313 = vmatpush.bf16.msra.mxu0 %v1283
        %1314 = vmatpush.bf16.msra.mxu0 %v1282
        %1315 = vmatpush.bf16.msra.mxu0 %v1281
        %1316 = vmatpush.bf16.msra.mxu0 %v1280
        %1317 = vmatpush.bf16.msra.mxu0 %v1279
        %1318 = vmatpush.bf16.msra.mxu0 %v1278
        %1319 = vmatpush.bf16.msra.mxu0 %v1277
        %1320 = vmatpush.bf16.msra.mxu0 %v1276
        %1321 = vmatmul.bf16.gmra.mxu0 %v1170
        %v1322 = vpop.f32.mrf.mxu0
        %v1323 = vadd.f32 %v1310, %v1322
        %v1324 = vpop.f32.mrf.mxu0
        %1325 = vdwg.mxu0
        %v1326 = vadd.f32 %v961, %v1323
        %1327 = vst [vmem:[%s349] sm:$0xff] %v1326
        %s1328 = sand.u32 %s165, 1
        %s1329 = scalar_lea.sflag [#allocation4], %s1328
        %s1330 = sand.u32 %s165, 1
        %s1331 = smul.addr %s1330, 8
        %s1332 = scalar_lea.vmem [#allocation13], %s1331
        // Predicated region
        $region69: #{tpu_custom_call.1} parent=43 // pred_check
          %p1333 = pneg %p175
        $region70: #{tpu_custom_call.1} parent=43 // pred_check_branch
          %1335 = sbr.rel (%p1333) target = $region72
        $region71: #{tpu_custom_call.1} parent=43 // pred_region
          %1337 = vsyncadd %s1329, 0
          %s1338 = smul.addr %s26, 8
          %s1339 = scalar_lea.hbm %s6, %s1338
          %s1341 = sshll.u32 %s1332, 4
          %s1342 = int_to_ptr.vmem [resolvable:$true] %s1341
          %s1343 = sshll.u32 %s1339, 4
          %s1344 = int_to_ptr.hbm [resolvable:$true] %s1343
          %1346 = dma.vmem_to_hbm [thread:$0]  %s1342, 128, %s1344, %s1329
        $region72: #{tpu_custom_call.1} parent=43 // pred_fallthru
          _
      $region44: #{tpu_custom_call.1} parent=5 // pred_fallthru
        _
      %p1347 = scmp.le.s32.totalorder 2, %s21
      // Predicated region
      $region73: #{tpu_custom_call.1} parent=5 // pred_check
        %p1348 = pneg %p1347
      $region74: #{tpu_custom_call.1} parent=5 // pred_check_branch
        %1350 = sbr.rel (%p1348) target = $region76
      $region75: #{tpu_custom_call.1} parent=5 // pred_region
        %s1351 = ssub.s32 %s21, 2
        // Predicated region
        $region77: #{tpu_custom_call.1} parent=75 // pred_check
          %p1352 = pneg %p181
        $region78: #{tpu_custom_call.1} parent=75 // pred_check_branch
          %1354 = sbr.rel (%p1352) target = $region80
        $region79: #{tpu_custom_call.1} parent=75 // pred_region
          %s1355 = sand.u32 %s166, 1
          %s1356 = scalar_lea.sflag [#allocation4], %s1355
          %s1357 = sand.u32 %s166, 1
          %s1358 = smul.addr %s1357, 8
          %s1359 = scalar_lea.vmem [#allocation13], %s1358
          %1361 = dma.done %s1356, 128
        $region80: #{tpu_custom_call.1} parent=75 // pred_fallthru
          _
      $region76: #{tpu_custom_call.1} parent=5 // pred_fallthru
        _
    $region6: #{tpu_custom_call.1} parent=1 // loop_footer
      %s25 = sadd.s32 1, %s21
    $region7: #{tpu_custom_call.1} parent=1 // loop_footer_branch
      %20 = sbr.rel target = $region3
    $region8: #{tpu_custom_call.1} parent=1 // loop_exit
      _
    %1362 = vsyncpa [#allocation3], 1
    %s1363 = scalar_lea.sflag [#allocation3], 1
    %1364 = vsyncpa %s1363, 1
    %1365 = vsyncpa [#allocation6], 1
    %1366 = vsyncpa [#allocation9], 1
    %1367 = vsyncpa [#allocation12], 1
    %1368 = vsyncpa [#allocation4], 1
    %s1369 = scalar_lea.sflag [#allocation4], 1
    %1370 = vsyncpa %s1369, 1

</llo_original>
